<compile_context>
chip_gen: v7x
topology: tpu7x:2x2x1
jax: 0.10.0
libtpu: 0.0.40
codegen_flags: <defaults>
</compile_context>

<pallas_src>
import functools

import numpy as np
import jax
import jax.numpy as jnp
from jax.experimental import pallas as pl
from jax.experimental.pallas import tpu as pltpu

GLOBAL_INPUT_SIZE = 768  # matches the PyTorch module (Linear(3820,1) => (L-4)//2*10 = 3820)
CPAD = 16                # conv channels padded 10 -> 16 (pad rows/cols are exact zeros)


# ----------------------------------------------------------------------------- kernel
def juger_kernel(x_ref, w1_ref, b1_ref, w2_ref, b2_ref, w3_ref, scal_ref, y_ref,
                 out_ref, *, batch, length, has_y):
    L = length
    C = b1_ref.shape[0]

    def shl(a, k):
        # a[..., p] <- a[..., (p + k) mod L]; static lane rotation on the XLU.
        if k == 0:
            return a
        return pltpu.roll(a, L - k, axis=1)

    # Load parameters once (outside the per-sample loop).
    w1 = w1_ref[...]                                 # (C, 3)   f32
    b1 = b1_ref[...]                                 # (C, 1)   f32
    w2 = w2_ref[...]                                 # (C, 3C)  mxu dtype (bf16 or f32)
    b2 = b2_ref[...]                                 # (C, 1)   f32
    w3 = w3_ref[...]                                 # (C, L)   f32, zero-expanded (NOT batch-tiled)
    mxu_dt = w2.dtype

    parts = []
    for b in range(batch):                           # 768-lane per-sample slabs
        xb = x_ref[:, b * L:(b + 1) * L]             # (1, L) — 128-aligned static lane slice

        # ---- Conv1d(1, C, 3) + ReLU : 3 shift-MACs on the VPU ----
        acc1 = w1[:, 0:1] * xb                       # (C,1)*(1,L) -> (C, L)
        for k in range(1, 3):
            acc1 = acc1 + w1[:, k:k + 1] * shl(xb, k)
        h1 = jnp.maximum(acc1 + b1, 0.0)             # (C, L) f32

        # ---- Conv1d(C, C, 3) + ReLU : ONE fused (C,3C)@(3C,L) MXU matmul, K=48 ----
        rhs = jnp.concatenate([shl(h1, k).astype(mxu_dt) for k in range(3)], axis=0)  # (3C, L)
        acc2 = jnp.dot(w2, rhs, preferred_element_type=jnp.float32)                   # (C, L) f32
        h2 = jnp.maximum(acc2 + b2, 0.0)             # (C, L)

        # ---- MaxPool1d(2) + Flatten + Linear(3820, 1) ----
        # m[:, p] = max(h2[:, p], h2[:, p+1]); odd/tail/pad-channel columns of w3 are
        # exactly zero, so the full sum of m * w3 equals the pooled dot-product.
        m = jnp.maximum(h2, shl(h2, 1))              # (C, L)
        v = jnp.sum(m * w3, keepdims=True) + scal_ref[0]      # (1,1): + b3
        if has_y:
            # Linear(2, 1) over cat([v, y[b]]) — scalars from SMEM.
            v = scal_ref[1] * v + scal_ref[2] * y_ref[b] + scal_ref[3]
        parts.append(v)

    # Single store of the (1, B) result.
    out_ref[...] = parts[0] if batch == 1 else jnp.concatenate(parts, axis=1)


# ------------------------------------------------------------------- one-time packing
def prepare_params(params, mxu_dtype=jnp.bfloat16):
    """Pack / zero-pad the PyTorch parameters ONCE (hoisted out of the forward path)."""
    w1, b1, w2, b2, w3, b3, w4, b4 = params
    L = GLOBAL_INPUT_SIZE
    C = CPAD

    w1p = jnp.zeros((C, 3), jnp.float32).at[:10, :].set(w1.reshape(10, 3).astype(jnp.float32))
    b1p = jnp.zeros((C, 1), jnp.float32).at[:10, 0].set(b1.astype(jnp.float32))

    # w2f[o, k*C + i] = w2[o, i, k]; padded rows/cols are exact zeros.
    w2t = jnp.transpose(w2.astype(jnp.float32), (2, 0, 1))          # (3, 10, 10) = [k, o, i]
    w2p = jnp.zeros((3, C, C), jnp.float32).at[:, :10, :10].set(w2t)
    w2f = jnp.transpose(w2p, (1, 0, 2)).reshape(C, 3 * C).astype(mxu_dtype)   # (C, 3C)

    b2p = jnp.zeros((C, 1), jnp.float32).at[:10, 0].set(b2.astype(jnp.float32))

    P = (L - 4) // 2                                  # 382 pooled positions / channel
    w3r = w3.reshape(10, P).astype(jnp.float32)       # flatten order c*382 + p
    w3e = jnp.zeros((C, L), jnp.float32).at[:10, 0:2 * P:2].set(w3r)   # (C, L), not batch-tiled

    scal = jnp.stack([b3[0], w4[0, 0], w4[0, 1], b4[0]]).astype(jnp.float32)   # SMEM scalars
    return (w1p, b1p, w2f, b2p, w3e, scal)


# ---------------------------------------------------------------------------- forward
@jax.jit
def _juger_forward_impl(x_ncw, packed, y):
    w1p, b1p, w2f, b2p, w3e, scal = packed
    B, _, L = x_ncw.shape
    N = B * L
    C = w1p.shape[0]

    x2 = x_ncw.reshape(1, N).astype(jnp.float32)      # lanes: p = b*L + t

    has_y = y is not None
    y_row = (y.astype(jnp.float32).reshape(B) if has_y
             else jnp.zeros((B,), jnp.float32))       # SMEM, B scalars

    kernel = functools.partial(juger_kernel, batch=B, length=L, has_y=has_y)
    vmem = lambda: pl.BlockSpec(memory_space=pltpu.MemorySpace.VMEM)
    smem = lambda: pl.BlockSpec(memory_space=pltpu.MemorySpace.SMEM)

    flops = B * (2 * 3 * C * L            # conv1
                 + 2 * C * (3 * C) * L    # fused conv2 matmul
                 + 4 * C * L)             # pool max + w3 mul + reduce
    bytes_accessed = int(
        x2.size * 4 + w1p.size * 4 + b1p.size * 4 + b2p.size * 4 + w3e.size * 4
        + w2f.size * np.dtype(w2f.dtype).itemsize + scal.size * 4 + y_row.size * 4 + B * 4)

    out = pl.pallas_call(
        kernel,
        out_shape=jax.ShapeDtypeStruct((1, B), jnp.float32),
        in_specs=[vmem(),   # x    (1, N)
                  vmem(),   # w1   (C, 3)
                  vmem(),   # b1   (C, 1)
                  vmem(),   # w2f  (C, 3C)  mxu dtype
                  vmem(),   # b2   (C, 1)
                  vmem(),   # w3e  (C, L)   zero-expanded, shared across batch
                  smem(),   # [b3, w4_00, w4_01, b4]
                  smem()],  # y    (B,)
        out_specs=vmem(),
        cost_estimate=pl.CostEstimate(flops=flops, transcendentals=0,
                                      bytes_accessed=bytes_accessed),
    )(x2, w1p, b1p, w2f, b2p, w3e, scal, y_row)
    return out.reshape(B, 1)


def juger_forward(x_ncw, packed, y=None):
    return _juger_forward_impl(x_ncw, packed, y)


# -------------------------------------------------------------------- params / reference
def xavier_uniform(key, shape, fan_in, fan_out):
    bound = float(np.sqrt(6.0 / (fan_in + fan_out)))
    return jax.random.uniform(key, shape, jnp.float32, -bound, bound)


def make_params(key):
    ks = jax.random.split(key, 8)
    L = GLOBAL_INPUT_SIZE
    d3 = (L - 4) * 5                                   # 3820
    w1 = xavier_uniform(ks[0], (10, 1, 3), 1 * 3, 10 * 3)
    b1 = jax.random.uniform(ks[1], (10,), jnp.float32, -1 / np.sqrt(3), 1 / np.sqrt(3))
    w2 = xavier_uniform(ks[2], (10, 10, 3), 10 * 3, 10 * 3)
    b2 = jax.random.uniform(ks[3], (10,), jnp.float32, -1 / np.sqrt(30), 1 / np.sqrt(30))
    w3 = xavier_uniform(ks[4], (1, d3), d3, 1)
    b3 = jax.random.uniform(ks[5], (1,), jnp.float32, -1 / np.sqrt(d3), 1 / np.sqrt(d3))
    w4 = xavier_uniform(ks[6], (1, 2), 2, 1)
    b4 = jax.random.uniform(ks[7], (1,), jnp.float32, -1 / np.sqrt(2), 1 / np.sqrt(2))
    return (w1, b1, w2, b2, w3, b3, w4, b4)


def ref_forward(x_ncw, params, y=None, mxu_dtype=jnp.float32):
    """Pure-JAX reference mirroring the PyTorch forward.

    `mxu_dtype` casts only the conv2 operands (matching the kernel's MXU fast path)
    so the bf16 kernel can be validated tightly as well."""
    w1, b1, w2, b2, w3, b3, w4, b4 = params
    hi = jax.lax.Precision.HIGHEST
    dn = ('NCH', 'OIH', 'NCH')
    h = jax.lax.conv_general_dilated(x_ncw, w1, (1,), 'VALID',
                                     dimension_numbers=dn, precision=hi)
    h = jnp.maximum(h + b1[None, :, None], 0.0)
    prec2 = hi if mxu_dtype == jnp.float32 else None
    h = jax.lax.conv_general_dilated(h.astype(mxu_dtype), w2.astype(mxu_dtype), (1,), 'VALID',
                                     dimension_numbers=dn, precision=prec2,
                                     preferred_element_type=jnp.float32)
    h = jnp.maximum(h + b2[None, :, None], 0.0)
    B, C, L = h.shape
    h = h.reshape(B, C, L // 2, 2).max(axis=-1)        # MaxPool1d(2)
    h = h.reshape(B, C * (L // 2))                     # Flatten
    out = jnp.dot(h, w3.T, precision=hi) + b3          # Linear(3820, 1)
    if y is not None:
        out = jnp.dot(jnp.concatenate([out, y], axis=1), w4.T, precision=hi) + b4
    return out


# --------------------------------------------------------------------------------- main
if __name__ == "__main__":
    key = jax.random.PRNGKey(0)
    kp, kx, ky = jax.random.split(key, 3)
    params = make_params(kp)

    B = 2
    x = jax.random.normal(kx, (B, 1, GLOBAL_INPUT_SIZE), jnp.float32)
    y = jax.random.normal(ky, (B, 1), jnp.float32)

    # --- exact path (f32 MXU operands): tight check against the f32 reference ---
    packed_f32 = prepare_params(params, mxu_dtype=jnp.float32)
    out_f32 = jax.block_until_ready(juger_forward(x, packed_f32))
    out_f32_y = jax.block_until_ready(juger_forward(x, packed_f32, y))
    ref_no_y = ref_forward(x, params)
    ref_with_y = ref_forward(x, params, y)
    np.testing.assert_allclose(np.asarray(out_f32), np.asarray(ref_no_y),
                               rtol=2e-3, atol=2e-3)
    np.testing.assert_allclose(np.asarray(out_f32_y), np.asarray(ref_with_y),
                               rtol=2e-3, atol=2e-3)

    # --- fast path (bf16 MXU operands, native on v6e/v7x): check against a reference
    #     that uses the same bf16 conv2 operands (accumulation is f32 in both). ---
    packed = prepare_params(params)                    # default: bf16 MXU operands
    out_no_y = jax.block_until_ready(juger_forward(x, packed))
    out_with_y = jax.block_until_ready(juger_forward(x, packed, y))
    ref_bf_no_y = ref_forward(x, params, mxu_dtype=jnp.bfloat16)
    ref_bf_with_y = ref_forward(x, params, y, mxu_dtype=jnp.bfloat16)
    assert out_no_y.shape == (B, 1) and out_with_y.shape == (B, 1)
    np.testing.assert_allclose(np.asarray(out_no_y), np.asarray(ref_bf_no_y),
                               rtol=5e-3, atol=5e-3)
    np.testing.assert_allclose(np.asarray(out_with_y), np.asarray(ref_bf_with_y),
                               rtol=5e-3, atol=5e-3)
    print("KERNEL_OK")
</pallas_src>

<mosaic_0001>
module attributes {stable_mosaic.version = 11 : i64} {
  func.func @juger_kernel(%arg0: memref<1x1536xf32, #tpu.memory_space<vmem>>, %arg1: memref<16x3xf32, #tpu.memory_space<vmem>>, %arg2: memref<16x1xf32, #tpu.memory_space<vmem>>, %arg3: memref<16x48xf32, #tpu.memory_space<vmem>>, %arg4: memref<16x1xf32, #tpu.memory_space<vmem>>, %arg5: memref<16x768xf32, #tpu.memory_space<vmem>>, %arg6: memref<4xf32, #tpu.memory_space<smem>>, %arg7: memref<2xf32, #tpu.memory_space<smem>>, %arg8: memref<1x2xf32, #tpu.memory_space<vmem>>) attributes {dimension_semantics = [], scalar_prefetch = 0 : i64, scratch_operands = 0 : i64, tpu.core_type = #tpu.core_type<tc>} {
    %c0 = arith.constant 0 : index
    %c0_0 = arith.constant 0 : index
    %0 = vector.load %arg1[%c0, %c0_0] : memref<16x3xf32, #tpu.memory_space<vmem>>, vector<16x3xf32>
    %c0_1 = arith.constant 0 : index
    %c0_2 = arith.constant 0 : index
    %1 = vector.load %arg2[%c0_1, %c0_2] : memref<16x1xf32, #tpu.memory_space<vmem>>, vector<16x1xf32>
    %c0_3 = arith.constant 0 : index
    %c0_4 = arith.constant 0 : index
    %2 = vector.load %arg3[%c0_3, %c0_4] : memref<16x48xf32, #tpu.memory_space<vmem>>, vector<16x48xf32>
    %c0_5 = arith.constant 0 : index
    %c0_6 = arith.constant 0 : index
    %3 = vector.load %arg4[%c0_5, %c0_6] : memref<16x1xf32, #tpu.memory_space<vmem>>, vector<16x1xf32>
    %c0_7 = arith.constant 0 : index
    %c0_8 = arith.constant 0 : index
    %4 = vector.load %arg5[%c0_7, %c0_8] : memref<16x768xf32, #tpu.memory_space<vmem>>, vector<16x768xf32>
    %c0_9 = arith.constant 0 : index
    %c0_10 = arith.constant 0 : index
    %5 = vector.load %arg0[%c0_9, %c0_10] : memref<1x1536xf32, #tpu.memory_space<vmem>>, vector<1x768xf32>
    %6 = vector.extract_strided_slice %0 {offsets = [0, 0], sizes = [16, 1], strides = [1, 1]} : vector<16x3xf32> to vector<16x1xf32>
    %7 = vector.broadcast %6 : vector<16x1xf32> to vector<16x768xf32>
    %8 = vector.broadcast %5 : vector<1x768xf32> to vector<16x768xf32>
    %9 = arith.mulf %7, %8 : vector<16x768xf32>
    %10 = vector.extract_strided_slice %0 {offsets = [0, 1], sizes = [16, 1], strides = [1, 1]} : vector<16x3xf32> to vector<16x1xf32>
    %c767_i32 = arith.constant 767 : i32
    %11 = tpu.dynamic_rotate %5 by %c767_i32 dim 1 : vector<1x768xf32>, i32 -> vector<1x768xf32>
    %12 = vector.broadcast %10 : vector<16x1xf32> to vector<16x768xf32>
    %13 = vector.broadcast %11 : vector<1x768xf32> to vector<16x768xf32>
    %14 = arith.mulf %12, %13 : vector<16x768xf32>
    %15 = arith.addf %9, %14 : vector<16x768xf32>
    %16 = vector.extract_strided_slice %0 {offsets = [0, 2], sizes = [16, 1], strides = [1, 1]} : vector<16x3xf32> to vector<16x1xf32>
    %c766_i32 = arith.constant 766 : i32
    %17 = tpu.dynamic_rotate %5 by %c766_i32 dim 1 : vector<1x768xf32>, i32 -> vector<1x768xf32>
    %18 = vector.broadcast %16 : vector<16x1xf32> to vector<16x768xf32>
    %19 = vector.broadcast %17 : vector<1x768xf32> to vector<16x768xf32>
    %20 = arith.mulf %18, %19 : vector<16x768xf32>
    %21 = arith.addf %15, %20 : vector<16x768xf32>
    %22 = vector.broadcast %1 : vector<16x1xf32> to vector<16x768xf32>
    %23 = arith.addf %21, %22 : vector<16x768xf32>
    %cst = arith.constant 0.000000e+00 : f32
    %24 = vector.broadcast %cst : f32 to vector<16x768xf32>
    %25 = arith.maximumf %23, %24 : vector<16x768xf32>
    %c767_i32_11 = arith.constant 767 : i32
    %26 = tpu.dynamic_rotate %25 by %c767_i32_11 dim 1 : vector<16x768xf32>, i32 -> vector<16x768xf32>
    %c766_i32_12 = arith.constant 766 : i32
    %27 = tpu.dynamic_rotate %25 by %c766_i32_12 dim 1 : vector<16x768xf32>, i32 -> vector<16x768xf32>
    %28 = tpu.concatenate %25, %26, %27 in 0 : vector<16x768xf32>, vector<16x768xf32>, vector<16x768xf32> -> vector<48x768xf32>
    %cst_13 = arith.constant dense<0.000000e+00> : vector<16x768xf32>
    %29 = tpu.matmul %2, %28, %cst_13 {dimension_numbers = #tpu.dot_dimension_numbers<[1], [0], [0], [1], [0, 0, 1, 1], [], []>} : vector<16x48xf32>, vector<48x768xf32>, vector<16x768xf32> -> vector<16x768xf32>
    %30 = vector.broadcast %3 : vector<16x1xf32> to vector<16x768xf32>
    %31 = arith.addf %29, %30 : vector<16x768xf32>
    %cst_14 = arith.constant 0.000000e+00 : f32
    %32 = vector.broadcast %cst_14 : f32 to vector<16x768xf32>
    %33 = arith.maximumf %31, %32 : vector<16x768xf32>
    %c767_i32_15 = arith.constant 767 : i32
    %34 = tpu.dynamic_rotate %33 by %c767_i32_15 dim 1 : vector<16x768xf32>, i32 -> vector<16x768xf32>
    %35 = arith.maximumf %33, %34 : vector<16x768xf32>
    %36 = arith.mulf %35, %4 : vector<16x768xf32>
    %37 = vector.shape_cast %36 : vector<16x768xf32> to vector<1x16x768xf32>
    %cst_16 = arith.constant dense<0.000000e+00> : vector<1xf32>
    %38 = vector.multi_reduction <add>, %37, %cst_16 [1, 2] : vector<1x16x768xf32> to vector<1xf32>
    %39 = vector.shape_cast %38 : vector<1xf32> to vector<1x1x1xf32>
    %40 = vector.extract %39[0, 0, 0] : f32 from vector<1x1x1xf32>
    %41 = vector.broadcast %40 : f32 to vector<1x1xf32>
    %c0_17 = arith.constant 0 : index
    %42 = memref.load %arg6[%c0_17] : memref<4xf32, #tpu.memory_space<smem>>
    %43 = vector.broadcast %42 : f32 to vector<1x1xf32>
    %44 = arith.addf %41, %43 : vector<1x1xf32>
    %c0_18 = arith.constant 0 : index
    %c768 = arith.constant 768 : index
    %45 = vector.load %arg0[%c0_18, %c768] : memref<1x1536xf32, #tpu.memory_space<vmem>>, vector<1x768xf32>
    %46 = vector.extract_strided_slice %0 {offsets = [0, 0], sizes = [16, 1], strides = [1, 1]} : vector<16x3xf32> to vector<16x1xf32>
    %47 = vector.broadcast %46 : vector<16x1xf32> to vector<16x768xf32>
    %48 = vector.broadcast %45 : vector<1x768xf32> to vector<16x768xf32>
    %49 = arith.mulf %47, %48 : vector<16x768xf32>
    %50 = vector.extract_strided_slice %0 {offsets = [0, 1], sizes = [16, 1], strides = [1, 1]} : vector<16x3xf32> to vector<16x1xf32>
    %c767_i32_19 = arith.constant 767 : i32
    %51 = tpu.dynamic_rotate %45 by %c767_i32_19 dim 1 : vector<1x768xf32>, i32 -> vector<1x768xf32>
    %52 = vector.broadcast %50 : vector<16x1xf32> to vector<16x768xf32>
    %53 = vector.broadcast %51 : vector<1x768xf32> to vector<16x768xf32>
    %54 = arith.mulf %52, %53 : vector<16x768xf32>
    %55 = arith.addf %49, %54 : vector<16x768xf32>
    %56 = vector.extract_strided_slice %0 {offsets = [0, 2], sizes = [16, 1], strides = [1, 1]} : vector<16x3xf32> to vector<16x1xf32>
    %c766_i32_20 = arith.constant 766 : i32
    %57 = tpu.dynamic_rotate %45 by %c766_i32_20 dim 1 : vector<1x768xf32>, i32 -> vector<1x768xf32>
    %58 = vector.broadcast %56 : vector<16x1xf32> to vector<16x768xf32>
    %59 = vector.broadcast %57 : vector<1x768xf32> to vector<16x768xf32>
    %60 = arith.mulf %58, %59 : vector<16x768xf32>
    %61 = arith.addf %55, %60 : vector<16x768xf32>
    %62 = vector.broadcast %1 : vector<16x1xf32> to vector<16x768xf32>
    %63 = arith.addf %61, %62 : vector<16x768xf32>
    %cst_21 = arith.constant 0.000000e+00 : f32
    %64 = vector.broadcast %cst_21 : f32 to vector<16x768xf32>
    %65 = arith.maximumf %63, %64 : vector<16x768xf32>
    %c767_i32_22 = arith.constant 767 : i32
    %66 = tpu.dynamic_rotate %65 by %c767_i32_22 dim 1 : vector<16x768xf32>, i32 -> vector<16x768xf32>
    %c766_i32_23 = arith.constant 766 : i32
    %67 = tpu.dynamic_rotate %65 by %c766_i32_23 dim 1 : vector<16x768xf32>, i32 -> vector<16x768xf32>
    %68 = tpu.concatenate %65, %66, %67 in 0 : vector<16x768xf32>, vector<16x768xf32>, vector<16x768xf32> -> vector<48x768xf32>
    %cst_24 = arith.constant dense<0.000000e+00> : vector<16x768xf32>
    %69 = tpu.matmul %2, %68, %cst_24 {dimension_numbers = #tpu.dot_dimension_numbers<[1], [0], [0], [1], [0, 0, 1, 1], [], []>} : vector<16x48xf32>, vector<48x768xf32>, vector<16x768xf32> -> vector<16x768xf32>
    %70 = vector.broadcast %3 : vector<16x1xf32> to vector<16x768xf32>
    %71 = arith.addf %69, %70 : vector<16x768xf32>
    %cst_25 = arith.constant 0.000000e+00 : f32
    %72 = vector.broadcast %cst_25 : f32 to vector<16x768xf32>
    %73 = arith.maximumf %71, %72 : vector<16x768xf32>
    %c767_i32_26 = arith.constant 767 : i32
    %74 = tpu.dynamic_rotate %73 by %c767_i32_26 dim 1 : vector<16x768xf32>, i32 -> vector<16x768xf32>
    %75 = arith.maximumf %73, %74 : vector<16x768xf32>
    %76 = arith.mulf %75, %4 : vector<16x768xf32>
    %77 = vector.shape_cast %76 : vector<16x768xf32> to vector<1x16x768xf32>
    %cst_27 = arith.constant dense<0.000000e+00> : vector<1xf32>
    %78 = vector.multi_reduction <add>, %77, %cst_27 [1, 2] : vector<1x16x768xf32> to vector<1xf32>
    %79 = vector.shape_cast %78 : vector<1xf32> to vector<1x1x1xf32>
    %80 = vector.extract %79[0, 0, 0] : f32 from vector<1x1x1xf32>
    %81 = vector.broadcast %80 : f32 to vector<1x1xf32>
    %c0_28 = arith.constant 0 : index
    %82 = memref.load %arg6[%c0_28] : memref<4xf32, #tpu.memory_space<smem>>
    %83 = vector.broadcast %82 : f32 to vector<1x1xf32>
    %84 = arith.addf %81, %83 : vector<1x1xf32>
    %85 = tpu.concatenate %44, %84 in 1 : vector<1x1xf32>, vector<1x1xf32> -> vector<1x2xf32>
    %c0_29 = arith.constant 0 : index
    %c0_30 = arith.constant 0 : index
    %86 = vector.load %arg8[%c0_29, %c0_30] : memref<1x2xf32, #tpu.memory_space<vmem>>, vector<1x2xf32>
    tpu.vector_store %arg8[%c0_29, %c0_30], %85 {strides = array<i32>} : memref<1x2xf32, #tpu.memory_space<vmem>>, vector<1x2xf32>,
    return
  }
}

</mosaic_0001>

<llo_original>
// kernel: _juger_forward_impl.1
$region0: #{_juger_forward_impl.1}
  #allocation0 [shape = 'u32[]', space=smem, size = 0x4, offset = 0x4, fixed_abs, tag = 'smem constant byte address 0x4 - core index']
  #allocation1 [shape = 'u32[144,128]{1,0:T(1,128)}', space=vmem, size = 0x12000, scoped, tag = 'internal scratch']
  %s0 = inlined_call_operand.vmem [shape: f32[1,1536], index: 0, kind: input, shape index: {}]
  %s1 = inlined_call_operand.vmem [shape: f32[16,3], index: 1, kind: input, shape index: {}]
  %s2 = inlined_call_operand.vmem [shape: f32[16,1], index: 2, kind: input, shape index: {}]
  %s3 = inlined_call_operand.vmem [shape: f32[16,48], index: 3, kind: input, shape index: {}]
  %s4 = inlined_call_operand.vmem [shape: f32[16,1], index: 4, kind: input, shape index: {}]
  %s5 = inlined_call_operand.hbm [shape: f32[16,768], index: 5, kind: input, shape index: {}]
  %s6 = inlined_call_operand.vmem [shape: f32[4], index: 6, kind: input, shape index: {}]
  %s7 = inlined_call_operand.vmem [shape: f32[2], index: 7, kind: input, shape index: {}]
  %s8 = inlined_call_operand.hbm [shape: f32[1,2], index: 8, kind: output, shape index: {}]
  %s9 = sld [smem:[#allocation0]]
  $region54: #{_juger_forward_impl.1} parent=0
    _
  %s11 = ssub.s32 1, %s9
  %s12 = scalar_select 0, %s11, %s9
  $region1: #{_juger_forward_impl.1} parent=0
    #allocation2 [shape = 'u8[49152]{0}', space=vmem, size = 0xc000, scoped, tag = 'input window, operand 5, single buffered']
    #allocation3 [shape = 's32[1]{0}', space=sflag, size = 0x4, scoped, tag = 'scoped memory for _juger_forward_impl.1']
    #allocation4 [shape = 's32[1]{0}', space=sflag, size = 0x4, scoped, tag = 'scoped memory for _juger_forward_impl.1']
    #allocation5 [shape = 's32[1]{0}', space=sflag, size = 0x4, scoped, tag = 'scoped memory for _juger_forward_impl.1']
    #allocation6 [shape = 'u8[512]{0}', space=smem, size = 0x200, scoped, tag = 'input window, operand 6, single buffered']
    #allocation7 [shape = 'u8[512]{0}', space=smem, size = 0x200, scoped, tag = 'input window, operand 7, single buffered']
    #allocation8 [shape = 's32[1]{0}', space=sflag, size = 0x4, scoped, tag = 'scoped memory for _juger_forward_impl.1']
    #allocation9 [shape = 'u8[512]{0}', space=vmem, size = 0x400, scoped, tag = 'output window, operand 0, single buffered']
    %13 = vsyncpa [#allocation3], 0
    %14 = vsyncpa [#allocation5], 0
    %15 = vsyncpa [#allocation8], 0
    %16 = vsyncpa [#allocation4], 0
    // Predicated region
    $region2: #{_juger_forward_impl.1} parent=1 // pred_check
      _
    $region3: #{_juger_forward_impl.1} parent=1 // pred_check_branch
      %18 = sbr.rel (0) target = $region5
    $region4: #{_juger_forward_impl.1} parent=1 // pred_region
      _
    $region5: #{_juger_forward_impl.1} parent=1 // pred_fallthru
      _
    // Predicated region
    $region6: #{_juger_forward_impl.1} parent=1 // pred_check
      _
    $region7: #{_juger_forward_impl.1} parent=1 // pred_check_branch
      %20 = sbr.rel (0) target = $region9
    $region8: #{_juger_forward_impl.1} parent=1 // pred_region
      _
    $region9: #{_juger_forward_impl.1} parent=1 // pred_fallthru
      _
    // Predicated region
    $region10: #{_juger_forward_impl.1} parent=1 // pred_check
      _
    $region11: #{_juger_forward_impl.1} parent=1 // pred_check_branch
      %22 = sbr.rel (0) target = $region13
    $region12: #{_juger_forward_impl.1} parent=1 // pred_region
      _
    $region13: #{_juger_forward_impl.1} parent=1 // pred_fallthru
      _
    // Predicated region
    $region14: #{_juger_forward_impl.1} parent=1 // pred_check
      _
    $region15: #{_juger_forward_impl.1} parent=1 // pred_check_branch
      %24 = sbr.rel (0) target = $region17
    $region16: #{_juger_forward_impl.1} parent=1 // pred_region
      _
    $region17: #{_juger_forward_impl.1} parent=1 // pred_fallthru
      _
    // Predicated region
    $region18: #{_juger_forward_impl.1} parent=1 // pred_check
      _
    $region19: #{_juger_forward_impl.1} parent=1 // pred_check_branch
      %26 = sbr.rel (0) target = $region21
    $region20: #{_juger_forward_impl.1} parent=1 // pred_region
      _
    $region21: #{_juger_forward_impl.1} parent=1 // pred_fallthru
      _
    // Predicated region
    $region22: #{_juger_forward_impl.1} parent=1 // pred_check
      _
    $region23: #{_juger_forward_impl.1} parent=1 // pred_check_branch
      %28 = sbr.rel (0) target = $region25
    $region24: #{_juger_forward_impl.1} parent=1 // pred_region
      %s30 = ssub.s32 1536, 1536
      %31 = vsyncadd [#allocation3], %s30
      %s32 = sshll.u32 [#allocation2], 4
      %s33 = int_to_ptr.vmem [resolvable:$true] %s32
      %38 = dma.hbm_to_vmem [thread:$0]  %s5, 1536, %s33, [#allocation3], 768, 768, 48
    $region25: #{_juger_forward_impl.1} parent=1 // pred_fallthru
      _
    // Predicated region
    $region26: #{_juger_forward_impl.1} parent=1 // pred_check
      _
    $region27: #{_juger_forward_impl.1} parent=1 // pred_check_branch
      %40 = sbr.rel (0) target = $region29
    $region28: #{_juger_forward_impl.1} parent=1 // pred_region
      %s42 = ssub.s32 16, 16
      %43 = vsyncadd [#allocation5], %s42
      %s45 = sshll.u32 %s6, 4
      %s46 = int_to_ptr.vmem [resolvable:$true] %s45
      %48 = dma.vmem_to_smem %s46, 16, [#allocation6], [#allocation5]
    $region29: #{_juger_forward_impl.1} parent=1 // pred_fallthru
      _
    // Predicated region
    $region30: #{_juger_forward_impl.1} parent=1 // pred_check
      _
    $region31: #{_juger_forward_impl.1} parent=1 // pred_check_branch
      %50 = sbr.rel (0) target = $region33
    $region32: #{_juger_forward_impl.1} parent=1 // pred_region
      %s52 = ssub.s32 16, 16
      %53 = vsyncadd [#allocation8], %s52
      %s55 = sshll.u32 %s7, 4
      %s56 = int_to_ptr.vmem [resolvable:$true] %s55
      %58 = dma.vmem_to_smem %s56, 16, [#allocation7], [#allocation8]
    $region33: #{_juger_forward_impl.1} parent=1 // pred_fallthru
      _
    // Predicated region
    $region34: #{_juger_forward_impl.1} parent=1 // pred_check
      _
    $region35: #{_juger_forward_impl.1} parent=1 // pred_check_branch
      %60 = sbr.rel (0) target = $region37
    $region36: #{_juger_forward_impl.1} parent=1 // pred_region
      %61 = dma.done [#allocation3], 1536
    $region37: #{_juger_forward_impl.1} parent=1 // pred_fallthru
      _
    // Predicated region
    $region38: #{_juger_forward_impl.1} parent=1 // pred_check
      _
    $region39: #{_juger_forward_impl.1} parent=1 // pred_check_branch
      %63 = sbr.rel (0) target = $region41
    $region40: #{_juger_forward_impl.1} parent=1 // pred_region
      %64 = dma.done [#allocation5], 16
    $region41: #{_juger_forward_impl.1} parent=1 // pred_fallthru
      _
    // Predicated region
    $region42: #{_juger_forward_impl.1} parent=1 // pred_check
      _
    $region43: #{_juger_forward_impl.1} parent=1 // pred_check_branch
      %66 = sbr.rel (0) target = $region45
    $region44: #{_juger_forward_impl.1} parent=1 // pred_region
      %67 = dma.done [#allocation8], 16
    $region45: #{_juger_forward_impl.1} parent=1 // pred_fallthru
      _
    %68 = sfence
    %v69 = vld [vmem:[%s1] sm:$0xff]
    %v70 = vld [vmem:[%s1 + $0x8] sm:$0xff]
    %v71 = vld [vmem:[%s2] sm:$0xff]
    %v72 = vld [vmem:[%s2 + $0x8] sm:$0xff]
    %v73 = vld [vmem:[%s3] sm:$0xff]
    %v74 = vld [vmem:[%s3 + $0x8] sm:$0xff]
    %v75 = vld [vmem:[%s4] sm:$0xff]
    %v76 = vld [vmem:[%s4 + $0x8] sm:$0xff]
    %v77 = vld [vmem:[#allocation2] sm:$0xff]
    %v78 = vld [vmem:[#allocation2 + $0x8] sm:$0xff]
    %v79 = vld [vmem:[#allocation2 + $0x10] sm:$0xff]
    %v80 = vld [vmem:[#allocation2 + $0x18] sm:$0xff]
    %v81 = vld [vmem:[#allocation2 + $0x20] sm:$0xff]
    %v82 = vld [vmem:[#allocation2 + $0x28] sm:$0xff]
    %v83 = vld [vmem:[#allocation2 + $0x30] sm:$0xff]
    %v84 = vld [vmem:[#allocation2 + $0x38] sm:$0xff]
    %v85 = vld [vmem:[#allocation2 + $0x40] sm:$0xff]
    %v86 = vld [vmem:[#allocation2 + $0x48] sm:$0xff]
    %v87 = vld [vmem:[#allocation2 + $0x50] sm:$0xff]
    %v88 = vld [vmem:[#allocation2 + $0x58] sm:$0xff]
    %v89 = vld [vmem:[%s0] sm:$0x3f]
    %91 = vset.pattern.permute.xlu0 0
    %92 = vperm.xlu0 %91, %v69
    %v93 = vpop.permute.xlu0 %92
    %96 = vset.pattern.permute.xlu0 0
    %97 = vperm.xlu0 %96, %v70
    %v98 = vpop.permute.xlu0 %97
    %v101 = vlaneseq
    %v102 = vshrl.u32 %v101, 7
    %v103 = vsub.s32 0, %v102
    %v104 = vrot.slane %v89, %v103
    %v105 = vlaneseq
    %v106 = vshrl.u32 %v105, 7
    %v107 = vsub.s32 1, %v106
    %v108 = vrot.slane %v89, %v107
    %v109 = vlaneseq
    %v110 = vshrl.u32 %v109, 7
    %v111 = vsub.s32 2, %v110
    %v112 = vrot.slane %v89, %v111
    %v113 = vlaneseq
    %v114 = vshrl.u32 %v113, 7
    %v115 = vsub.s32 3, %v114
    %v116 = vrot.slane %v89, %v115
    %v117 = vlaneseq
    %v118 = vshrl.u32 %v117, 7
    %v119 = vsub.s32 4, %v118
    %v120 = vrot.slane %v89, %v119
    %v121 = vlaneseq
    %v122 = vshrl.u32 %v121, 7
    %v123 = vsub.s32 5, %v122
    %v124 = vrot.slane %v89, %v123
    %v131 = vmul.f32 %v93, %v104
    %v132 = vmul.f32 %v93, %v108
    %v133 = vmul.f32 %v93, %v112
    %v134 = vmul.f32 %v93, %v116
    %v135 = vmul.f32 %v93, %v120
    %v136 = vmul.f32 %v93, %v124
    %v137 = vmul.f32 %v98, %v104
    %v138 = vmul.f32 %v98, %v108
    %v139 = vmul.f32 %v98, %v112
    %v140 = vmul.f32 %v98, %v116
    %v141 = vmul.f32 %v98, %v120
    %v142 = vmul.f32 %v98, %v124
    %143 = vrot.lane.b32.xlu0 %v104, 127
    %v144 = vpop.permute.xlu0 %143
    %145 = vrot.lane.b32.xlu0 %v108, 127
    %v146 = vpop.permute.xlu0 %145
    %147 = vrot.lane.b32.xlu0 %v112, 127
    %v148 = vpop.permute.xlu0 %147
    %149 = vrot.lane.b32.xlu0 %v116, 127
    %v150 = vpop.permute.xlu0 %149
    %151 = vrot.lane.b32.xlu0 %v120, 127
    %v152 = vpop.permute.xlu0 %151
    %153 = vrot.lane.b32.xlu0 %v124, 127
    %v154 = vpop.permute.xlu0 %153
    %v155 = vlaneseq
    %v156 = vand.u32 %v155, 127
    %vm157 = vcmp.lt.s32.totalorder %v156, 127
    %v158 = vsel %vm157, %v152, %v154
    %v159 = vsel %vm157, %v150, %v152
    %v160 = vsel %vm157, %v148, %v150
    %v161 = vsel %vm157, %v146, %v148
    %v162 = vsel %vm157, %v144, %v146
    %v163 = vsel %vm157, %v154, %v144
    %164 = vset.pattern.permute.xlu0 1
    %165 = vperm.xlu0 %164, %v69
    %v166 = vpop.permute.xlu0 %165
    %168 = vset.pattern.permute.xlu0 1
    %169 = vperm.xlu0 %168, %v70
    %v170 = vpop.permute.xlu0 %169
    %v172 = vlaneseq
    %v173 = vshrl.u32 %v172, 7
    %v174 = vsub.s32 0, %v173
    %v175 = vrot.slane %v162, %v174
    %v176 = vlaneseq
    %v177 = vshrl.u32 %v176, 7
    %v178 = vsub.s32 0, %v177
    %v179 = vrot.slane %v161, %v178
    %v180 = vlaneseq
    %v181 = vshrl.u32 %v180, 7
    %v182 = vsub.s32 0, %v181
    %v183 = vrot.slane %v160, %v182
    %v184 = vlaneseq
    %v185 = vshrl.u32 %v184, 7
    %v186 = vsub.s32 0, %v185
    %v187 = vrot.slane %v159, %v186
    %v188 = vlaneseq
    %v189 = vshrl.u32 %v188, 7
    %v190 = vsub.s32 0, %v189
    %v191 = vrot.slane %v158, %v190
    %v192 = vlaneseq
    %v193 = vshrl.u32 %v192, 7
    %v194 = vsub.s32 0, %v193
    %v195 = vrot.slane %v163, %v194
    %v196 = vmul.f32 %v166, %v175
    %v197 = vmul.f32 %v166, %v179
    %v198 = vmul.f32 %v166, %v183
    %v199 = vmul.f32 %v166, %v187
    %v200 = vmul.f32 %v166, %v191
    %v201 = vmul.f32 %v166, %v195
    %v202 = vmul.f32 %v170, %v175
    %v203 = vmul.f32 %v170, %v179
    %v204 = vmul.f32 %v170, %v183
    %v205 = vmul.f32 %v170, %v187
    %v206 = vmul.f32 %v170, %v191
    %v207 = vmul.f32 %v170, %v195
    %v208 = vadd.f32 %v131, %v196
    %v209 = vadd.f32 %v132, %v197
    %v210 = vadd.f32 %v133, %v198
    %v211 = vadd.f32 %v134, %v199
    %v212 = vadd.f32 %v135, %v200
    %v213 = vadd.f32 %v136, %v201
    %v214 = vadd.f32 %v137, %v202
    %v215 = vadd.f32 %v138, %v203
    %v216 = vadd.f32 %v139, %v204
    %v217 = vadd.f32 %v140, %v205
    %v218 = vadd.f32 %v141, %v206
    %v219 = vadd.f32 %v142, %v207
    %220 = vrot.lane.b32.xlu0 %v104, 126
    %v221 = vpop.permute.xlu0 %220
    %222 = vrot.lane.b32.xlu0 %v108, 126
    %v223 = vpop.permute.xlu0 %222
    %224 = vrot.lane.b32.xlu0 %v112, 126
    %v225 = vpop.permute.xlu0 %224
    %226 = vrot.lane.b32.xlu0 %v116, 126
    %v227 = vpop.permute.xlu0 %226
    %228 = vrot.lane.b32.xlu0 %v120, 126
    %v229 = vpop.permute.xlu0 %228
    %230 = vrot.lane.b32.xlu0 %v124, 126
    %v231 = vpop.permute.xlu0 %230
    %vm232 = vcmp.lt.s32.totalorder %v156, 126
    %v233 = vsel %vm232, %v229, %v231
    %v234 = vsel %vm232, %v227, %v229
    %v235 = vsel %vm232, %v225, %v227
    %v236 = vsel %vm232, %v223, %v225
    %v237 = vsel %vm232, %v221, %v223
    %v238 = vsel %vm232, %v231, %v221
    %239 = vset.pattern.permute.xlu0 2
    %240 = vperm.xlu0 %239, %v69
    %v241 = vpop.permute.xlu0 %240
    %243 = vset.pattern.permute.xlu0 2
    %244 = vperm.xlu0 %243, %v70
    %v245 = vpop.permute.xlu0 %244
    %v247 = vlaneseq
    %v248 = vshrl.u32 %v247, 7
    %v249 = vsub.s32 0, %v248
    %v250 = vrot.slane %v237, %v249
    %v251 = vlaneseq
    %v252 = vshrl.u32 %v251, 7
    %v253 = vsub.s32 0, %v252
    %v254 = vrot.slane %v236, %v253
    %v255 = vlaneseq
    %v256 = vshrl.u32 %v255, 7
    %v257 = vsub.s32 0, %v256
    %v258 = vrot.slane %v235, %v257
    %v259 = vlaneseq
    %v260 = vshrl.u32 %v259, 7
    %v261 = vsub.s32 0, %v260
    %v262 = vrot.slane %v234, %v261
    %v263 = vlaneseq
    %v264 = vshrl.u32 %v263, 7
    %v265 = vsub.s32 0, %v264
    %v266 = vrot.slane %v233, %v265
    %v267 = vlaneseq
    %v268 = vshrl.u32 %v267, 7
    %v269 = vsub.s32 0, %v268
    %v270 = vrot.slane %v238, %v269
    %v271 = vmul.f32 %v241, %v250
    %v272 = vmul.f32 %v241, %v254
    %v273 = vmul.f32 %v241, %v258
    %v274 = vmul.f32 %v241, %v262
    %v275 = vmul.f32 %v241, %v266
    %v276 = vmul.f32 %v241, %v270
    %v277 = vmul.f32 %v245, %v250
    %v278 = vmul.f32 %v245, %v254
    %v279 = vmul.f32 %v245, %v258
    %v280 = vmul.f32 %v245, %v262
    %v281 = vmul.f32 %v245, %v266
    %v282 = vmul.f32 %v245, %v270
    %v283 = vadd.f32 %v208, %v271
    %v284 = vadd.f32 %v209, %v272
    %v285 = vadd.f32 %v210, %v273
    %v286 = vadd.f32 %v211, %v274
    %v287 = vadd.f32 %v212, %v275
    %v288 = vadd.f32 %v213, %v276
    %v289 = vadd.f32 %v214, %v277
    %v290 = vadd.f32 %v215, %v278
    %v291 = vadd.f32 %v216, %v279
    %v292 = vadd.f32 %v217, %v280
    %v293 = vadd.f32 %v218, %v281
    %v294 = vadd.f32 %v219, %v282
    %296 = vset.pattern.permute.xlu0 0
    %297 = vperm.xlu0 %296, %v71
    %v298 = vpop.permute.xlu0 %297
    %301 = vset.pattern.permute.xlu0 0
    %302 = vperm.xlu0 %301, %v72
    %v303 = vpop.permute.xlu0 %302
    %v305 = vadd.f32 %v283, %v298
    %v306 = vadd.f32 %v284, %v298
    %v307 = vadd.f32 %v285, %v298
    %v308 = vadd.f32 %v286, %v298
    %v309 = vadd.f32 %v287, %v298
    %v310 = vadd.f32 %v288, %v298
    %v311 = vadd.f32 %v289, %v303
    %v312 = vadd.f32 %v290, %v303
    %v313 = vadd.f32 %v291, %v303
    %v314 = vadd.f32 %v292, %v303
    %v315 = vadd.f32 %v293, %v303
    %v316 = vadd.f32 %v294, %v303
    %v317 = vmax.f32 %v305, 0.0
    %v318 = vmax.f32 %v306, 0.0
    %v319 = vmax.f32 %v307, 0.0
    %v320 = vmax.f32 %v308, 0.0
    %v321 = vmax.f32 %v309, 0.0
    %v322 = vmax.f32 %v310, 0.0
    %v323 = vmax.f32 %v311, 0.0
    %v324 = vmax.f32 %v312, 0.0
    %v325 = vmax.f32 %v313, 0.0
    %v326 = vmax.f32 %v314, 0.0
    %v327 = vmax.f32 %v315, 0.0
    %v328 = vmax.f32 %v316, 0.0
    %329 = vrot.lane.b32.xlu0 %v317, 127
    %v330 = vpop.permute.xlu0 %329
    %331 = vrot.lane.b32.xlu0 %v323, 127
    %v332 = vpop.permute.xlu0 %331
    %333 = vrot.lane.b32.xlu0 %v318, 127
    %v334 = vpop.permute.xlu0 %333
    %335 = vrot.lane.b32.xlu0 %v324, 127
    %v336 = vpop.permute.xlu0 %335
    %337 = vrot.lane.b32.xlu0 %v319, 127
    %v338 = vpop.permute.xlu0 %337
    %339 = vrot.lane.b32.xlu0 %v325, 127
    %v340 = vpop.permute.xlu0 %339
    %341 = vrot.lane.b32.xlu0 %v320, 127
    %v342 = vpop.permute.xlu0 %341
    %343 = vrot.lane.b32.xlu0 %v326, 127
    %v344 = vpop.permute.xlu0 %343
    %345 = vrot.lane.b32.xlu0 %v321, 127
    %v346 = vpop.permute.xlu0 %345
    %347 = vrot.lane.b32.xlu0 %v327, 127
    %v348 = vpop.permute.xlu0 %347
    %349 = vrot.lane.b32.xlu0 %v322, 127
    %v350 = vpop.permute.xlu0 %349
    %351 = vrot.lane.b32.xlu0 %v328, 127
    %v352 = vpop.permute.xlu0 %351
    %v353 = vsel %vm157, %v346, %v350
    %v354 = vsel %vm157, %v348, %v352
    %v355 = vsel %vm157, %v342, %v346
    %v356 = vsel %vm157, %v344, %v348
    %v357 = vsel %vm157, %v338, %v342
    %v358 = vsel %vm157, %v340, %v344
    %v359 = vsel %vm157, %v334, %v338
    %v360 = vsel %vm157, %v336, %v340
    %v361 = vsel %vm157, %v330, %v334
    %v362 = vsel %vm157, %v332, %v336
    %v363 = vsel %vm157, %v350, %v330
    %v364 = vsel %vm157, %v352, %v332
    %365 = vrot.lane.b32.xlu0 %v317, 126
    %v366 = vpop.permute.xlu0 %365
    %367 = vrot.lane.b32.xlu0 %v323, 126
    %v368 = vpop.permute.xlu0 %367
    %369 = vrot.lane.b32.xlu0 %v318, 126
    %v370 = vpop.permute.xlu0 %369
    %371 = vrot.lane.b32.xlu0 %v324, 126
    %v372 = vpop.permute.xlu0 %371
    %373 = vrot.lane.b32.xlu0 %v319, 126
    %v374 = vpop.permute.xlu0 %373
    %375 = vrot.lane.b32.xlu0 %v325, 126
    %v376 = vpop.permute.xlu0 %375
    %377 = vrot.lane.b32.xlu0 %v320, 126
    %v378 = vpop.permute.xlu0 %377
    %379 = vrot.lane.b32.xlu0 %v326, 126
    %v380 = vpop.permute.xlu0 %379
    %381 = vrot.lane.b32.xlu0 %v321, 126
    %v382 = vpop.permute.xlu0 %381
    %383 = vrot.lane.b32.xlu0 %v327, 126
    %v384 = vpop.permute.xlu0 %383
    %385 = vrot.lane.b32.xlu0 %v322, 126
    %v386 = vpop.permute.xlu0 %385
    %387 = vrot.lane.b32.xlu0 %v328, 126
    %v388 = vpop.permute.xlu0 %387
    %v389 = vsel %vm232, %v382, %v386
    %v390 = vsel %vm232, %v384, %v388
    %v391 = vsel %vm232, %v378, %v382
    %v392 = vsel %vm232, %v380, %v384
    %v393 = vsel %vm232, %v374, %v378
    %v394 = vsel %vm232, %v376, %v380
    %v395 = vsel %vm232, %v370, %v374
    %v396 = vsel %vm232, %v372, %v376
    %v397 = vsel %vm232, %v366, %v370
    %v398 = vsel %vm232, %v368, %v372
    %v399 = vsel %vm232, %v386, %v366
    %v400 = vsel %vm232, %v388, %v368
    %402 = vset.pattern.permute.xlu0 0
    %403 = vperm.xlu0 %402, %v75
    %v404 = vpop.permute.xlu0 %403
    %407 = vset.pattern.permute.xlu0 0
    %408 = vperm.xlu0 %407, %v76
    %v409 = vpop.permute.xlu0 %408
    %vm411 = vcmask 392192
    %v413 = vsel %vm411, %v73, 0
    %v416 = vsel %vm411, %v74, 0
    %418 = vmatprep.subr.mxu0 %v318
    %419 = vmatpush1.msra.mxu0 %v317
    %420 = vmatprep.subr.mxu0 %v324
    %421 = vmatpush1.msra.mxu0 %v323
    %422 = vmatprep.subr.mxu0 %v359
    %423 = vmatpush1.msra.mxu0 %v361
    %424 = vmatprep.subr.mxu0 %v360
    %425 = vmatpush1.msra.mxu0 %v362
    %426 = vmatprep.subr.mxu0 %v395
    %427 = vmatpush1.msra.mxu0 %v397
    %428 = vmatprep.subr.mxu0 %v396
    %429 = vmatpush1.msra.mxu0 %v398
    %430 = vmatprep.subr.mxu0 0.0
    %431 = vmatpush1.msra.mxu0 0.0
    %432 = vmatprep.subr.mxu0 0.0
    %433 = vmatpush1.msra.mxu0 0.0
    %434 = vmatprep.subr.mxu0 0.0
    %435 = vmatpush1.msra.mxu0 0.0
    %436 = vmatprep.subr.mxu0 0.0
    %437 = vmatpush1.msra.mxu0 0.0
    %438 = vmatprep.subr.mxu0 0.0
    %439 = vmatpush1.msra.mxu0 0.0
    %440 = vmatprep.subr.mxu0 0.0
    %441 = vmatpush1.msra.mxu0 0.0
    %442 = vmatprep.subr.mxu0 0.0
    %443 = vmatpush1.msra.mxu0 0.0
    %444 = vmatprep.subr.mxu0 0.0
    %445 = vmatpush1.msra.mxu0 0.0
    %446 = vmatprep.subr.mxu0 0.0
    %447 = vmatpush1.msra.mxu0 0.0
    %448 = vmatprep.subr.mxu0 0.0
    %449 = vmatpush1.msra.mxu0 0.0
    %450 = vmatprep.subr.mxu0 0.0
    %451 = vmatpush1.msra.mxu0 0.0
    %452 = vmatprep.subr.mxu0 0.0
    %453 = vmatpush1.msra.mxu0 0.0
    %454 = vmatprep.subr.mxu0 0.0
    %455 = vmatpush1.msra.mxu0 0.0
    %456 = vmatprep.subr.mxu0 0.0
    %457 = vmatpush1.msra.mxu0 0.0
    %458 = vmatprep.subr.mxu0 0.0
    %459 = vmatpush1.msra.mxu0 0.0
    %460 = vmatprep.subr.mxu0 0.0
    %461 = vmatpush1.msra.mxu0 0.0
    %462 = vmatprep.subr.mxu0 0.0
    %463 = vmatpush1.msra.mxu0 0.0
    %464 = vmatprep.subr.mxu0 0.0
    %465 = vmatpush1.msra.mxu0 0.0
    %466 = vmatprep.subr.mxu0 0.0
    %467 = vmatpush1.msra.mxu0 0.0
    %468 = vmatprep.subr.mxu0 0.0
    %469 = vmatpush1.msra.mxu0 0.0
    %470 = vmatprep.subr.mxu0 0.0
    %471 = vmatpush1.msra.mxu0 0.0
    %472 = vmatprep.subr.mxu0 0.0
    %473 = vmatpush1.msra.mxu0 0.0
    %474 = vmatprep.subr.mxu0 0.0
    %475 = vmatpush1.msra.mxu0 0.0
    %476 = vmatprep.subr.mxu0 0.0
    %477 = vmatpush1.msra.mxu0 0.0
    %478 = vmatprep.subr.mxu0 0.0
    %479 = vmatpush1.msra.mxu0 0.0
    %480 = vmatprep.subr.mxu0 0.0
    %481 = vmatpush1.msra.mxu0 0.0
    %482 = vmatprep.mubr.f32.mxu0 0.0
    %483 = vmatmul.mubr.f32.gmra.mrb[0].mxu0 %v413
    %v484 = vpop.f32.mrb[0].mxu0
    %v485 = vadd.f32 %v404, %v484
    %v486 = vpop.f32.mrb[0].mxu0
    %v487 = vadd.f32 %v404, %v486
    %488 = vmatprep.mubr.f32.mxu0 0.0
    %489 = vmatmul.mubr.f32.gmra.mrb[0].mxu0 %v416
    %v490 = vpop.f32.mrb[0].mxu0
    %v491 = vadd.f32 %v409, %v490
    %v492 = vpop.f32.mrb[0].mxu0
    %v493 = vadd.f32 %v409, %v492
    %494 = vdwg.mxu0
    %495 = vmatprep.subr.mxu0 %v320
    %496 = vmatpush1.msra.mxu0 %v319
    %497 = vmatprep.subr.mxu0 %v326
    %498 = vmatpush1.msra.mxu0 %v325
    %499 = vmatprep.subr.mxu0 %v355
    %500 = vmatpush1.msra.mxu0 %v357
    %501 = vmatprep.subr.mxu0 %v356
    %502 = vmatpush1.msra.mxu0 %v358
    %503 = vmatprep.subr.mxu0 %v391
    %504 = vmatpush1.msra.mxu0 %v393
    %505 = vmatprep.subr.mxu0 %v392
    %506 = vmatpush1.msra.mxu0 %v394
    %507 = vmatprep.subr.mxu0 0.0
    %508 = vmatpush1.msra.mxu0 0.0
    %509 = vmatprep.subr.mxu0 0.0
    %510 = vmatpush1.msra.mxu0 0.0
    %511 = vmatprep.subr.mxu0 0.0
    %512 = vmatpush1.msra.mxu0 0.0
    %513 = vmatprep.subr.mxu0 0.0
    %514 = vmatpush1.msra.mxu0 0.0
    %515 = vmatprep.subr.mxu0 0.0
    %516 = vmatpush1.msra.mxu0 0.0
    %517 = vmatprep.subr.mxu0 0.0
    %518 = vmatpush1.msra.mxu0 0.0
    %519 = vmatprep.subr.mxu0 0.0
    %520 = vmatpush1.msra.mxu0 0.0
    %521 = vmatprep.subr.mxu0 0.0
    %522 = vmatpush1.msra.mxu0 0.0
    %523 = vmatprep.subr.mxu0 0.0
    %524 = vmatpush1.msra.mxu0 0.0
    %525 = vmatprep.subr.mxu0 0.0
    %526 = vmatpush1.msra.mxu0 0.0
    %527 = vmatprep.subr.mxu0 0.0
    %528 = vmatpush1.msra.mxu0 0.0
    %529 = vmatprep.subr.mxu0 0.0
    %530 = vmatpush1.msra.mxu0 0.0
    %531 = vmatprep.subr.mxu0 0.0
    %532 = vmatpush1.msra.mxu0 0.0
    %533 = vmatprep.subr.mxu0 0.0
    %534 = vmatpush1.msra.mxu0 0.0
    %535 = vmatprep.subr.mxu0 0.0
    %536 = vmatpush1.msra.mxu0 0.0
    %537 = vmatprep.subr.mxu0 0.0
    %538 = vmatpush1.msra.mxu0 0.0
    %539 = vmatprep.subr.mxu0 0.0
    %540 = vmatpush1.msra.mxu0 0.0
    %541 = vmatprep.subr.mxu0 0.0
    %542 = vmatpush1.msra.mxu0 0.0
    %543 = vmatprep.subr.mxu0 0.0
    %544 = vmatpush1.msra.mxu0 0.0
    %545 = vmatprep.subr.mxu0 0.0
    %546 = vmatpush1.msra.mxu0 0.0
    %547 = vmatprep.subr.mxu0 0.0
    %548 = vmatpush1.msra.mxu0 0.0
    %549 = vmatprep.subr.mxu0 0.0
    %550 = vmatpush1.msra.mxu0 0.0
    %551 = vmatprep.subr.mxu0 0.0
    %552 = vmatpush1.msra.mxu0 0.0
    %553 = vmatprep.subr.mxu0 0.0
    %554 = vmatpush1.msra.mxu0 0.0
    %555 = vmatprep.subr.mxu0 0.0
    %556 = vmatpush1.msra.mxu0 0.0
    %557 = vmatprep.subr.mxu0 0.0
    %558 = vmatpush1.msra.mxu0 0.0
    %559 = vmatprep.mubr.f32.mxu0 0.0
    %560 = vmatmul.mubr.f32.gmra.mrb[0].mxu0 %v413
    %v561 = vpop.f32.mrb[0].mxu0
    %v562 = vadd.f32 %v404, %v561
    %v563 = vpop.f32.mrb[0].mxu0
    %v564 = vadd.f32 %v404, %v563
    %565 = vmatprep.mubr.f32.mxu0 0.0
    %566 = vmatmul.mubr.f32.gmra.mrb[0].mxu0 %v416
    %v567 = vpop.f32.mrb[0].mxu0
    %v568 = vadd.f32 %v409, %v567
    %v569 = vpop.f32.mrb[0].mxu0
    %v570 = vadd.f32 %v409, %v569
    %571 = vdwg.mxu0
    %572 = vmatprep.subr.mxu0 %v322
    %573 = vmatpush1.msra.mxu0 %v321
    %574 = vmatprep.subr.mxu0 %v328
    %575 = vmatpush1.msra.mxu0 %v327
    %576 = vmatprep.subr.mxu0 %v363
    %577 = vmatpush1.msra.mxu0 %v353
    %578 = vmatprep.subr.mxu0 %v364
    %579 = vmatpush1.msra.mxu0 %v354
    %580 = vmatprep.subr.mxu0 %v399
    %581 = vmatpush1.msra.mxu0 %v389
    %582 = vmatprep.subr.mxu0 %v400
    %583 = vmatpush1.msra.mxu0 %v390
    %584 = vmatprep.subr.mxu0 0.0
    %585 = vmatpush1.msra.mxu0 0.0
    %586 = vmatprep.subr.mxu0 0.0
    %587 = vmatpush1.msra.mxu0 0.0
    %588 = vmatprep.subr.mxu0 0.0
    %589 = vmatpush1.msra.mxu0 0.0
    %590 = vmatprep.subr.mxu0 0.0
    %591 = vmatpush1.msra.mxu0 0.0
    %592 = vmatprep.subr.mxu0 0.0
    %593 = vmatpush1.msra.mxu0 0.0
    %594 = vmatprep.subr.mxu0 0.0
    %595 = vmatpush1.msra.mxu0 0.0
    %596 = vmatprep.subr.mxu0 0.0
    %597 = vmatpush1.msra.mxu0 0.0
    %598 = vmatprep.subr.mxu0 0.0
    %599 = vmatpush1.msra.mxu0 0.0
    %600 = vmatprep.subr.mxu0 0.0
    %601 = vmatpush1.msra.mxu0 0.0
    %602 = vmatprep.subr.mxu0 0.0
    %603 = vmatpush1.msra.mxu0 0.0
    %604 = vmatprep.subr.mxu0 0.0
    %605 = vmatpush1.msra.mxu0 0.0
    %606 = vmatprep.subr.mxu0 0.0
    %607 = vmatpush1.msra.mxu0 0.0
    %608 = vmatprep.subr.mxu0 0.0
    %609 = vmatpush1.msra.mxu0 0.0
    %610 = vmatprep.subr.mxu0 0.0
    %611 = vmatpush1.msra.mxu0 0.0
    %612 = vmatprep.subr.mxu0 0.0
    %613 = vmatpush1.msra.mxu0 0.0
    %614 = vmatprep.subr.mxu0 0.0
    %615 = vmatpush1.msra.mxu0 0.0
    %616 = vmatprep.subr.mxu0 0.0
    %617 = vmatpush1.msra.mxu0 0.0
    %618 = vmatprep.subr.mxu0 0.0
    %619 = vmatpush1.msra.mxu0 0.0
    %620 = vmatprep.subr.mxu0 0.0
    %621 = vmatpush1.msra.mxu0 0.0
    %622 = vmatprep.subr.mxu0 0.0
    %623 = vmatpush1.msra.mxu0 0.0
    %624 = vmatprep.subr.mxu0 0.0
    %625 = vmatpush1.msra.mxu0 0.0
    %626 = vmatprep.subr.mxu0 0.0
    %627 = vmatpush1.msra.mxu0 0.0
    %628 = vmatprep.subr.mxu0 0.0
    %629 = vmatpush1.msra.mxu0 0.0
    %630 = vmatprep.subr.mxu0 0.0
    %631 = vmatpush1.msra.mxu0 0.0
    %632 = vmatprep.subr.mxu0 0.0
    %633 = vmatpush1.msra.mxu0 0.0
    %634 = vmatprep.subr.mxu0 0.0
    %635 = vmatpush1.msra.mxu0 0.0
    %636 = vmatprep.mubr.f32.mxu0 0.0
    %637 = vmatmul.mubr.f32.gmra.mrb[0].mxu0 %v413
    %v638 = vpop.f32.mrb[0].mxu0
    %v639 = vadd.f32 %v404, %v638
    %v640 = vpop.f32.mrb[0].mxu0
    %v641 = vadd.f32 %v404, %v640
    %642 = vmatprep.mubr.f32.mxu0 0.0
    %643 = vmatmul.mubr.f32.gmra.mrb[0].mxu0 %v416
    %v644 = vpop.f32.mrb[0].mxu0
    %v645 = vadd.f32 %v409, %v644
    %v646 = vpop.f32.mrb[0].mxu0
    %v647 = vadd.f32 %v409, %v646
    %648 = vdwg.mxu0
    %v649 = vmax.f32 %v485, 0.0
    %v650 = vmax.f32 %v487, 0.0
    %v651 = vmax.f32 %v562, 0.0
    %v652 = vmax.f32 %v564, 0.0
    %v653 = vmax.f32 %v639, 0.0
    %v654 = vmax.f32 %v641, 0.0
    %v655 = vmax.f32 %v491, 0.0
    %v656 = vmax.f32 %v493, 0.0
    %v657 = vmax.f32 %v568, 0.0
    %v658 = vmax.f32 %v570, 0.0
    %v659 = vmax.f32 %v645, 0.0
    %v660 = vmax.f32 %v647, 0.0
    %661 = vrot.lane.b32.xlu0 %v649, 127
    %v662 = vpop.permute.xlu0 %661
    %663 = vrot.lane.b32.xlu0 %v655, 127
    %v664 = vpop.permute.xlu0 %663
    %665 = vrot.lane.b32.xlu0 %v650, 127
    %v666 = vpop.permute.xlu0 %665
    %667 = vrot.lane.b32.xlu0 %v656, 127
    %v668 = vpop.permute.xlu0 %667
    %669 = vrot.lane.b32.xlu0 %v651, 127
    %v670 = vpop.permute.xlu0 %669
    %671 = vrot.lane.b32.xlu0 %v657, 127
    %v672 = vpop.permute.xlu0 %671
    %673 = vrot.lane.b32.xlu0 %v652, 127
    %v674 = vpop.permute.xlu0 %673
    %675 = vrot.lane.b32.xlu0 %v658, 127
    %v676 = vpop.permute.xlu0 %675
    %677 = vrot.lane.b32.xlu0 %v653, 127
    %v678 = vpop.permute.xlu0 %677
    %679 = vrot.lane.b32.xlu0 %v659, 127
    %v680 = vpop.permute.xlu0 %679
    %681 = vrot.lane.b32.xlu0 %v654, 127
    %v682 = vpop.permute.xlu0 %681
    %683 = vrot.lane.b32.xlu0 %v660, 127
    %v684 = vpop.permute.xlu0 %683
    %v685 = vsel %vm157, %v678, %v682
    %v686 = vsel %vm157, %v680, %v684
    %v687 = vsel %vm157, %v674, %v678
    %v688 = vsel %vm157, %v676, %v680
    %v689 = vsel %vm157, %v670, %v674
    %v690 = vsel %vm157, %v672, %v676
    %v691 = vsel %vm157, %v666, %v670
    %v692 = vsel %vm157, %v668, %v672
    %v693 = vsel %vm157, %v662, %v666
    %v694 = vsel %vm157, %v664, %v668
    %v695 = vsel %vm157, %v682, %v662
    %v696 = vsel %vm157, %v684, %v664
    %v697 = vmax.f32 %v649, %v693
    %v698 = vmax.f32 %v650, %v691
    %v699 = vmax.f32 %v651, %v689
    %v700 = vmax.f32 %v652, %v687
    %v701 = vmax.f32 %v653, %v685
    %v702 = vmax.f32 %v654, %v695
    %v703 = vmax.f32 %v655, %v694
    %v704 = vmax.f32 %v656, %v692
    %v705 = vmax.f32 %v657, %v690
    %v706 = vmax.f32 %v658, %v688
    %v707 = vmax.f32 %v659, %v686
    %v708 = vmax.f32 %v660, %v696
    %v709 = vmul.f32 %v697, %v77
    %v710 = vmul.f32 %v698, %v78
    %v711 = vmul.f32 %v699, %v79
    %v712 = vmul.f32 %v700, %v80
    %v713 = vmul.f32 %v701, %v81
    %v714 = vmul.f32 %v702, %v82
    %v715 = vmul.f32 %v703, %v83
    %v716 = vmul.f32 %v704, %v84
    %v717 = vmul.f32 %v705, %v85
    %v718 = vmul.f32 %v706, %v86
    %v719 = vmul.f32 %v707, %v87
    %v720 = vmul.f32 %v708, %v88
    %v721 = vadd.f32 %v709, %v710
    %v722 = vadd.f32 %v721, %v711
    %v723 = vadd.f32 %v722, %v712
    %v724 = vadd.f32 %v723, %v713
    %v725 = vadd.f32 %v724, %v714
    %v726 = vadd.f32 %v725, %v715
    %v727 = vadd.f32 %v726, %v716
    %v728 = vadd.f32 %v727, %v717
    %v729 = vadd.f32 %v728, %v718
    %v730 = vadd.f32 %v729, %v719
    %v731 = vadd.f32 %v730, %v720
    %732 = vadd.xlane.f32.xlu0 %v731
    %v733 = vpop.xlane.xlu0 %732
    %v734 = vrot.slane %v733, 4
    %v735 = vadd.f32 %v733, %v734
    %v736 = vrot.slane %v735, 2
    %v737 = vadd.f32 %v735, %v736
    %v738 = vrot.slane %v737, 1
    %v739 = vadd.f32 %v737, %v738
    %s740 = vtos %v739
    %v741 = vstv %s740
    %s742 = sld [smem:[#allocation6]]
    %v743 = vstv %s742
    %v744 = vadd.f32 %v741, %v743
    %v745 = vld [vmem:[%s0 + $0x6] sm:$0x3f]
    %v747 = vlaneseq
    %v748 = vshrl.u32 %v747, 7
    %v749 = vsub.s32 0, %v748
    %v750 = vrot.slane %v745, %v749
    %v751 = vlaneseq
    %v752 = vshrl.u32 %v751, 7
    %v753 = vsub.s32 1, %v752
    %v754 = vrot.slane %v745, %v753
    %v755 = vlaneseq
    %v756 = vshrl.u32 %v755, 7
    %v757 = vsub.s32 2, %v756
    %v758 = vrot.slane %v745, %v757
    %v759 = vlaneseq
    %v760 = vshrl.u32 %v759, 7
    %v761 = vsub.s32 3, %v760
    %v762 = vrot.slane %v745, %v761
    %v763 = vlaneseq
    %v764 = vshrl.u32 %v763, 7
    %v765 = vsub.s32 4, %v764
    %v766 = vrot.slane %v745, %v765
    %v767 = vlaneseq
    %v768 = vshrl.u32 %v767, 7
    %v769 = vsub.s32 5, %v768
    %v770 = vrot.slane %v745, %v769
    %v777 = vmul.f32 %v93, %v750
    %v778 = vmul.f32 %v93, %v754
    %v779 = vmul.f32 %v93, %v758
    %v780 = vmul.f32 %v93, %v762
    %v781 = vmul.f32 %v93, %v766
    %v782 = vmul.f32 %v93, %v770
    %v783 = vmul.f32 %v98, %v750
    %v784 = vmul.f32 %v98, %v754
    %v785 = vmul.f32 %v98, %v758
    %v786 = vmul.f32 %v98, %v762
    %v787 = vmul.f32 %v98, %v766
    %v788 = vmul.f32 %v98, %v770
    %789 = vrot.lane.b32.xlu0 %v750, 127
    %v790 = vpop.permute.xlu0 %789
    %791 = vrot.lane.b32.xlu0 %v754, 127
    %v792 = vpop.permute.xlu0 %791
    %793 = vrot.lane.b32.xlu0 %v758, 127
    %v794 = vpop.permute.xlu0 %793
    %795 = vrot.lane.b32.xlu0 %v762, 127
    %v796 = vpop.permute.xlu0 %795
    %797 = vrot.lane.b32.xlu0 %v766, 127
    %v798 = vpop.permute.xlu0 %797
    %799 = vrot.lane.b32.xlu0 %v770, 127
    %v800 = vpop.permute.xlu0 %799
    %v801 = vsel %vm157, %v798, %v800
    %v802 = vsel %vm157, %v796, %v798
    %v803 = vsel %vm157, %v794, %v796
    %v804 = vsel %vm157, %v792, %v794
    %v805 = vsel %vm157, %v790, %v792
    %v806 = vsel %vm157, %v800, %v790
    %v807 = vlaneseq
    %v808 = vshrl.u32 %v807, 7
    %v809 = vsub.s32 0, %v808
    %v810 = vrot.slane %v805, %v809
    %v811 = vlaneseq
    %v812 = vshrl.u32 %v811, 7
    %v813 = vsub.s32 0, %v812
    %v814 = vrot.slane %v804, %v813
    %v815 = vlaneseq
    %v816 = vshrl.u32 %v815, 7
    %v817 = vsub.s32 0, %v816
    %v818 = vrot.slane %v803, %v817
    %v819 = vlaneseq
    %v820 = vshrl.u32 %v819, 7
    %v821 = vsub.s32 0, %v820
    %v822 = vrot.slane %v802, %v821
    %v823 = vlaneseq
    %v824 = vshrl.u32 %v823, 7
    %v825 = vsub.s32 0, %v824
    %v826 = vrot.slane %v801, %v825
    %v827 = vlaneseq
    %v828 = vshrl.u32 %v827, 7
    %v829 = vsub.s32 0, %v828
    %v830 = vrot.slane %v806, %v829
    %v831 = vmul.f32 %v166, %v810
    %v832 = vmul.f32 %v166, %v814
    %v833 = vmul.f32 %v166, %v818
    %v834 = vmul.f32 %v166, %v822
    %v835 = vmul.f32 %v166, %v826
    %v836 = vmul.f32 %v166, %v830
    %v837 = vmul.f32 %v170, %v810
    %v838 = vmul.f32 %v170, %v814
    %v839 = vmul.f32 %v170, %v818
    %v840 = vmul.f32 %v170, %v822
    %v841 = vmul.f32 %v170, %v826
    %v842 = vmul.f32 %v170, %v830
    %v843 = vadd.f32 %v777, %v831
    %v844 = vadd.f32 %v778, %v832
    %v845 = vadd.f32 %v779, %v833
    %v846 = vadd.f32 %v780, %v834
    %v847 = vadd.f32 %v781, %v835
    %v848 = vadd.f32 %v782, %v836
    %v849 = vadd.f32 %v783, %v837
    %v850 = vadd.f32 %v784, %v838
    %v851 = vadd.f32 %v785, %v839
    %v852 = vadd.f32 %v786, %v840
    %v853 = vadd.f32 %v787, %v841
    %v854 = vadd.f32 %v788, %v842
    %855 = vrot.lane.b32.xlu0 %v750, 126
    %v856 = vpop.permute.xlu0 %855
    %857 = vrot.lane.b32.xlu0 %v754, 126
    %v858 = vpop.permute.xlu0 %857
    %859 = vrot.lane.b32.xlu0 %v758, 126
    %v860 = vpop.permute.xlu0 %859
    %861 = vrot.lane.b32.xlu0 %v762, 126
    %v862 = vpop.permute.xlu0 %861
    %863 = vrot.lane.b32.xlu0 %v766, 126
    %v864 = vpop.permute.xlu0 %863
    %865 = vrot.lane.b32.xlu0 %v770, 126
    %v866 = vpop.permute.xlu0 %865
    %v867 = vsel %vm232, %v864, %v866
    %v868 = vsel %vm232, %v862, %v864
    %v869 = vsel %vm232, %v860, %v862
    %v870 = vsel %vm232, %v858, %v860
    %v871 = vsel %vm232, %v856, %v858
    %v872 = vsel %vm232, %v866, %v856
    %v873 = vlaneseq
    %v874 = vshrl.u32 %v873, 7
    %v875 = vsub.s32 0, %v874
    %v876 = vrot.slane %v871, %v875
    %v877 = vlaneseq
    %v878 = vshrl.u32 %v877, 7
    %v879 = vsub.s32 0, %v878
    %v880 = vrot.slane %v870, %v879
    %v881 = vlaneseq
    %v882 = vshrl.u32 %v881, 7
    %v883 = vsub.s32 0, %v882
    %v884 = vrot.slane %v869, %v883
    %v885 = vlaneseq
    %v886 = vshrl.u32 %v885, 7
    %v887 = vsub.s32 0, %v886
    %v888 = vrot.slane %v868, %v887
    %v889 = vlaneseq
    %v890 = vshrl.u32 %v889, 7
    %v891 = vsub.s32 0, %v890
    %v892 = vrot.slane %v867, %v891
    %v893 = vlaneseq
    %v894 = vshrl.u32 %v893, 7
    %v895 = vsub.s32 0, %v894
    %v896 = vrot.slane %v872, %v895
    %v897 = vmul.f32 %v241, %v876
    %v898 = vmul.f32 %v241, %v880
    %v899 = vmul.f32 %v241, %v884
    %v900 = vmul.f32 %v241, %v888
    %v901 = vmul.f32 %v241, %v892
    %v902 = vmul.f32 %v241, %v896
    %v903 = vmul.f32 %v245, %v876
    %v904 = vmul.f32 %v245, %v880
    %v905 = vmul.f32 %v245, %v884
    %v906 = vmul.f32 %v245, %v888
    %v907 = vmul.f32 %v245, %v892
    %v908 = vmul.f32 %v245, %v896
    %v909 = vadd.f32 %v843, %v897
    %v910 = vadd.f32 %v844, %v898
    %v911 = vadd.f32 %v845, %v899
    %v912 = vadd.f32 %v846, %v900
    %v913 = vadd.f32 %v847, %v901
    %v914 = vadd.f32 %v848, %v902
    %v915 = vadd.f32 %v849, %v903
    %v916 = vadd.f32 %v850, %v904
    %v917 = vadd.f32 %v851, %v905
    %v918 = vadd.f32 %v852, %v906
    %v919 = vadd.f32 %v853, %v907
    %v920 = vadd.f32 %v854, %v908
    %v921 = vadd.f32 %v909, %v298
    %v922 = vadd.f32 %v910, %v298
    %v923 = vadd.f32 %v911, %v298
    %v924 = vadd.f32 %v912, %v298
    %v925 = vadd.f32 %v913, %v298
    %v926 = vadd.f32 %v914, %v298
    %v927 = vadd.f32 %v915, %v303
    %v928 = vadd.f32 %v916, %v303
    %v929 = vadd.f32 %v917, %v303
    %v930 = vadd.f32 %v918, %v303
    %v931 = vadd.f32 %v919, %v303
    %v932 = vadd.f32 %v920, %v303
    %v933 = vmax.f32 %v921, 0.0
    %v934 = vmax.f32 %v922, 0.0
    %v935 = vmax.f32 %v923, 0.0
    %v936 = vmax.f32 %v924, 0.0
    %v937 = vmax.f32 %v925, 0.0
    %v938 = vmax.f32 %v926, 0.0
    %v939 = vmax.f32 %v927, 0.0
    %v940 = vmax.f32 %v928, 0.0
    %v941 = vmax.f32 %v929, 0.0
    %v942 = vmax.f32 %v930, 0.0
    %v943 = vmax.f32 %v931, 0.0
    %v944 = vmax.f32 %v932, 0.0
    %945 = vrot.lane.b32.xlu0 %v933, 127
    %v946 = vpop.permute.xlu0 %945
    %947 = vrot.lane.b32.xlu0 %v939, 127
    %v948 = vpop.permute.xlu0 %947
    %949 = vrot.lane.b32.xlu0 %v934, 127
    %v950 = vpop.permute.xlu0 %949
    %951 = vrot.lane.b32.xlu0 %v940, 127
    %v952 = vpop.permute.xlu0 %951
    %953 = vrot.lane.b32.xlu0 %v935, 127
    %v954 = vpop.permute.xlu0 %953
    %955 = vrot.lane.b32.xlu0 %v941, 127
    %v956 = vpop.permute.xlu0 %955
    %957 = vrot.lane.b32.xlu0 %v936, 127
    %v958 = vpop.permute.xlu0 %957
    %959 = vrot.lane.b32.xlu0 %v942, 127
    %v960 = vpop.permute.xlu0 %959
    %961 = vrot.lane.b32.xlu0 %v937, 127
    %v962 = vpop.permute.xlu0 %961
    %963 = vrot.lane.b32.xlu0 %v943, 127
    %v964 = vpop.permute.xlu0 %963
    %965 = vrot.lane.b32.xlu0 %v938, 127
    %v966 = vpop.permute.xlu0 %965
    %967 = vrot.lane.b32.xlu0 %v944, 127
    %v968 = vpop.permute.xlu0 %967
    %v969 = vsel %vm157, %v962, %v966
    %v970 = vsel %vm157, %v964, %v968
    %v971 = vsel %vm157, %v958, %v962
    %v972 = vsel %vm157, %v960, %v964
    %v973 = vsel %vm157, %v954, %v958
    %v974 = vsel %vm157, %v956, %v960
    %v975 = vsel %vm157, %v950, %v954
    %v976 = vsel %vm157, %v952, %v956
    %v977 = vsel %vm157, %v946, %v950
    %v978 = vsel %vm157, %v948, %v952
    %v979 = vsel %vm157, %v966, %v946
    %v980 = vsel %vm157, %v968, %v948
    %981 = vrot.lane.b32.xlu0 %v933, 126
    %v982 = vpop.permute.xlu0 %981
    %983 = vrot.lane.b32.xlu0 %v939, 126
    %v984 = vpop.permute.xlu0 %983
    %985 = vrot.lane.b32.xlu0 %v934, 126
    %v986 = vpop.permute.xlu0 %985
    %987 = vrot.lane.b32.xlu0 %v940, 126
    %v988 = vpop.permute.xlu0 %987
    %989 = vrot.lane.b32.xlu0 %v935, 126
    %v990 = vpop.permute.xlu0 %989
    %991 = vrot.lane.b32.xlu0 %v941, 126
    %v992 = vpop.permute.xlu0 %991
    %993 = vrot.lane.b32.xlu0 %v936, 126
    %v994 = vpop.permute.xlu0 %993
    %995 = vrot.lane.b32.xlu0 %v942, 126
    %v996 = vpop.permute.xlu0 %995
    %997 = vrot.lane.b32.xlu0 %v937, 126
    %v998 = vpop.permute.xlu0 %997
    %999 = vrot.lane.b32.xlu0 %v943, 126
    %v1000 = vpop.permute.xlu0 %999
    %1001 = vrot.lane.b32.xlu0 %v938, 126
    %v1002 = vpop.permute.xlu0 %1001
    %1003 = vrot.lane.b32.xlu0 %v944, 126
    %v1004 = vpop.permute.xlu0 %1003
    %v1005 = vsel %vm232, %v998, %v1002
    %v1006 = vsel %vm232, %v1000, %v1004
    %v1007 = vsel %vm232, %v994, %v998
    %v1008 = vsel %vm232, %v996, %v1000
    %v1009 = vsel %vm232, %v990, %v994
    %v1010 = vsel %vm232, %v992, %v996
    %v1011 = vsel %vm232, %v986, %v990
    %v1012 = vsel %vm232, %v988, %v992
    %v1013 = vsel %vm232, %v982, %v986
    %v1014 = vsel %vm232, %v984, %v988
    %v1015 = vsel %vm232, %v1002, %v982
    %v1016 = vsel %vm232, %v1004, %v984
    %1017 = vmatprep.subr.mxu0 %v934
    %1018 = vmatpush1.msra.mxu0 %v933
    %1019 = vmatprep.subr.mxu0 %v940
    %1020 = vmatpush1.msra.mxu0 %v939
    %1021 = vmatprep.subr.mxu0 %v975
    %1022 = vmatpush1.msra.mxu0 %v977
    %1023 = vmatprep.subr.mxu0 %v976
    %1024 = vmatpush1.msra.mxu0 %v978
    %1025 = vmatprep.subr.mxu0 %v1011
    %1026 = vmatpush1.msra.mxu0 %v1013
    %1027 = vmatprep.subr.mxu0 %v1012
    %1028 = vmatpush1.msra.mxu0 %v1014
    %1029 = vmatprep.subr.mxu0 0.0
    %1030 = vmatpush1.msra.mxu0 0.0
    %1031 = vmatprep.subr.mxu0 0.0
    %1032 = vmatpush1.msra.mxu0 0.0
    %1033 = vmatprep.subr.mxu0 0.0
    %1034 = vmatpush1.msra.mxu0 0.0
    %1035 = vmatprep.subr.mxu0 0.0
    %1036 = vmatpush1.msra.mxu0 0.0
    %1037 = vmatprep.subr.mxu0 0.0
    %1038 = vmatpush1.msra.mxu0 0.0
    %1039 = vmatprep.subr.mxu0 0.0
    %1040 = vmatpush1.msra.mxu0 0.0
    %1041 = vmatprep.subr.mxu0 0.0
    %1042 = vmatpush1.msra.mxu0 0.0
    %1043 = vmatprep.subr.mxu0 0.0
    %1044 = vmatpush1.msra.mxu0 0.0
    %1045 = vmatprep.subr.mxu0 0.0
    %1046 = vmatpush1.msra.mxu0 0.0
    %1047 = vmatprep.subr.mxu0 0.0
    %1048 = vmatpush1.msra.mxu0 0.0
    %1049 = vmatprep.subr.mxu0 0.0
    %1050 = vmatpush1.msra.mxu0 0.0
    %1051 = vmatprep.subr.mxu0 0.0
    %1052 = vmatpush1.msra.mxu0 0.0
    %1053 = vmatprep.subr.mxu0 0.0
    %1054 = vmatpush1.msra.mxu0 0.0
    %1055 = vmatprep.subr.mxu0 0.0
    %1056 = vmatpush1.msra.mxu0 0.0
    %1057 = vmatprep.subr.mxu0 0.0
    %1058 = vmatpush1.msra.mxu0 0.0
    %1059 = vmatprep.subr.mxu0 0.0
    %1060 = vmatpush1.msra.mxu0 0.0
    %1061 = vmatprep.subr.mxu0 0.0
    %1062 = vmatpush1.msra.mxu0 0.0
    %1063 = vmatprep.subr.mxu0 0.0
    %1064 = vmatpush1.msra.mxu0 0.0
    %1065 = vmatprep.subr.mxu0 0.0
    %1066 = vmatpush1.msra.mxu0 0.0
    %1067 = vmatprep.subr.mxu0 0.0
    %1068 = vmatpush1.msra.mxu0 0.0
    %1069 = vmatprep.subr.mxu0 0.0
    %1070 = vmatpush1.msra.mxu0 0.0
    %1071 = vmatprep.subr.mxu0 0.0
    %1072 = vmatpush1.msra.mxu0 0.0
    %1073 = vmatprep.subr.mxu0 0.0
    %1074 = vmatpush1.msra.mxu0 0.0
    %1075 = vmatprep.subr.mxu0 0.0
    %1076 = vmatpush1.msra.mxu0 0.0
    %1077 = vmatprep.subr.mxu0 0.0
    %1078 = vmatpush1.msra.mxu0 0.0
    %1079 = vmatprep.subr.mxu0 0.0
    %1080 = vmatpush1.msra.mxu0 0.0
    %1081 = vmatprep.mubr.f32.mxu0 0.0
    %1082 = vmatmul.mubr.f32.gmra.mrb[0].mxu0 %v413
    %v1083 = vpop.f32.mrb[0].mxu0
    %v1084 = vadd.f32 %v404, %v1083
    %v1085 = vpop.f32.mrb[0].mxu0
    %v1086 = vadd.f32 %v404, %v1085
    %1087 = vmatprep.mubr.f32.mxu0 0.0
    %1088 = vmatmul.mubr.f32.gmra.mrb[0].mxu0 %v416
    %v1089 = vpop.f32.mrb[0].mxu0
    %v1090 = vadd.f32 %v409, %v1089
    %v1091 = vpop.f32.mrb[0].mxu0
    %v1092 = vadd.f32 %v409, %v1091
    %1093 = vdwg.mxu0
    %1094 = vmatprep.subr.mxu0 %v936
    %1095 = vmatpush1.msra.mxu0 %v935
    %1096 = vmatprep.subr.mxu0 %v942
    %1097 = vmatpush1.msra.mxu0 %v941
    %1098 = vmatprep.subr.mxu0 %v971
    %1099 = vmatpush1.msra.mxu0 %v973
    %1100 = vmatprep.subr.mxu0 %v972
    %1101 = vmatpush1.msra.mxu0 %v974
    %1102 = vmatprep.subr.mxu0 %v1007
    %1103 = vmatpush1.msra.mxu0 %v1009
    %1104 = vmatprep.subr.mxu0 %v1008
    %1105 = vmatpush1.msra.mxu0 %v1010
    %1106 = vmatprep.subr.mxu0 0.0
    %1107 = vmatpush1.msra.mxu0 0.0
    %1108 = vmatprep.subr.mxu0 0.0
    %1109 = vmatpush1.msra.mxu0 0.0
    %1110 = vmatprep.subr.mxu0 0.0
    %1111 = vmatpush1.msra.mxu0 0.0
    %1112 = vmatprep.subr.mxu0 0.0
    %1113 = vmatpush1.msra.mxu0 0.0
    %1114 = vmatprep.subr.mxu0 0.0
    %1115 = vmatpush1.msra.mxu0 0.0
    %1116 = vmatprep.subr.mxu0 0.0
    %1117 = vmatpush1.msra.mxu0 0.0
    %1118 = vmatprep.subr.mxu0 0.0
    %1119 = vmatpush1.msra.mxu0 0.0
    %1120 = vmatprep.subr.mxu0 0.0
    %1121 = vmatpush1.msra.mxu0 0.0
    %1122 = vmatprep.subr.mxu0 0.0
    %1123 = vmatpush1.msra.mxu0 0.0
    %1124 = vmatprep.subr.mxu0 0.0
    %1125 = vmatpush1.msra.mxu0 0.0
    %1126 = vmatprep.subr.mxu0 0.0
    %1127 = vmatpush1.msra.mxu0 0.0
    %1128 = vmatprep.subr.mxu0 0.0
    %1129 = vmatpush1.msra.mxu0 0.0
    %1130 = vmatprep.subr.mxu0 0.0
    %1131 = vmatpush1.msra.mxu0 0.0
    %1132 = vmatprep.subr.mxu0 0.0
    %1133 = vmatpush1.msra.mxu0 0.0
    %1134 = vmatprep.subr.mxu0 0.0
    %1135 = vmatpush1.msra.mxu0 0.0
    %1136 = vmatprep.subr.mxu0 0.0
    %1137 = vmatpush1.msra.mxu0 0.0
    %1138 = vmatprep.subr.mxu0 0.0
    %1139 = vmatpush1.msra.mxu0 0.0
    %1140 = vmatprep.subr.mxu0 0.0
    %1141 = vmatpush1.msra.mxu0 0.0
    %1142 = vmatprep.subr.mxu0 0.0
    %1143 = vmatpush1.msra.mxu0 0.0
    %1144 = vmatprep.subr.mxu0 0.0
    %1145 = vmatpush1.msra.mxu0 0.0
    %1146 = vmatprep.subr.mxu0 0.0
    %1147 = vmatpush1.msra.mxu0 0.0
    %1148 = vmatprep.subr.mxu0 0.0
    %1149 = vmatpush1.msra.mxu0 0.0
    %1150 = vmatprep.subr.mxu0 0.0
    %1151 = vmatpush1.msra.mxu0 0.0
    %1152 = vmatprep.subr.mxu0 0.0
    %1153 = vmatpush1.msra.mxu0 0.0
    %1154 = vmatprep.subr.mxu0 0.0
    %1155 = vmatpush1.msra.mxu0 0.0
    %1156 = vmatprep.subr.mxu0 0.0
    %1157 = vmatpush1.msra.mxu0 0.0
    %1158 = vmatprep.mubr.f32.mxu0 0.0
    %1159 = vmatmul.mubr.f32.gmra.mrb[0].mxu0 %v413
    %v1160 = vpop.f32.mrb[0].mxu0
    %v1161 = vadd.f32 %v404, %v1160
    %v1162 = vpop.f32.mrb[0].mxu0
    %v1163 = vadd.f32 %v404, %v1162
    %1164 = vmatprep.mubr.f32.mxu0 0.0
    %1165 = vmatmul.mubr.f32.gmra.mrb[0].mxu0 %v416
    %v1166 = vpop.f32.mrb[0].mxu0
    %v1167 = vadd.f32 %v409, %v1166
    %v1168 = vpop.f32.mrb[0].mxu0
    %v1169 = vadd.f32 %v409, %v1168
    %1170 = vdwg.mxu0
    %1171 = vmatprep.subr.mxu0 %v938
    %1172 = vmatpush1.msra.mxu0 %v937
    %1173 = vmatprep.subr.mxu0 %v944
    %1174 = vmatpush1.msra.mxu0 %v943
    %1175 = vmatprep.subr.mxu0 %v979
    %1176 = vmatpush1.msra.mxu0 %v969
    %1177 = vmatprep.subr.mxu0 %v980
    %1178 = vmatpush1.msra.mxu0 %v970
    %1179 = vmatprep.subr.mxu0 %v1015
    %1180 = vmatpush1.msra.mxu0 %v1005
    %1181 = vmatprep.subr.mxu0 %v1016
    %1182 = vmatpush1.msra.mxu0 %v1006
    %1183 = vmatprep.subr.mxu0 0.0
    %1184 = vmatpush1.msra.mxu0 0.0
    %1185 = vmatprep.subr.mxu0 0.0
    %1186 = vmatpush1.msra.mxu0 0.0
    %1187 = vmatprep.subr.mxu0 0.0
    %1188 = vmatpush1.msra.mxu0 0.0
    %1189 = vmatprep.subr.mxu0 0.0
    %1190 = vmatpush1.msra.mxu0 0.0
    %1191 = vmatprep.subr.mxu0 0.0
    %1192 = vmatpush1.msra.mxu0 0.0
    %1193 = vmatprep.subr.mxu0 0.0
    %1194 = vmatpush1.msra.mxu0 0.0
    %1195 = vmatprep.subr.mxu0 0.0
    %1196 = vmatpush1.msra.mxu0 0.0
    %1197 = vmatprep.subr.mxu0 0.0
    %1198 = vmatpush1.msra.mxu0 0.0
    %1199 = vmatprep.subr.mxu0 0.0
    %1200 = vmatpush1.msra.mxu0 0.0
    %1201 = vmatprep.subr.mxu0 0.0
    %1202 = vmatpush1.msra.mxu0 0.0
    %1203 = vmatprep.subr.mxu0 0.0
    %1204 = vmatpush1.msra.mxu0 0.0
    %1205 = vmatprep.subr.mxu0 0.0
    %1206 = vmatpush1.msra.mxu0 0.0
    %1207 = vmatprep.subr.mxu0 0.0
    %1208 = vmatpush1.msra.mxu0 0.0
    %1209 = vmatprep.subr.mxu0 0.0
    %1210 = vmatpush1.msra.mxu0 0.0
    %1211 = vmatprep.subr.mxu0 0.0
    %1212 = vmatpush1.msra.mxu0 0.0
    %1213 = vmatprep.subr.mxu0 0.0
    %1214 = vmatpush1.msra.mxu0 0.0
    %1215 = vmatprep.subr.mxu0 0.0
    %1216 = vmatpush1.msra.mxu0 0.0
    %1217 = vmatprep.subr.mxu0 0.0
    %1218 = vmatpush1.msra.mxu0 0.0
    %1219 = vmatprep.subr.mxu0 0.0
    %1220 = vmatpush1.msra.mxu0 0.0
    %1221 = vmatprep.subr.mxu0 0.0
    %1222 = vmatpush1.msra.mxu0 0.0
    %1223 = vmatprep.subr.mxu0 0.0
    %1224 = vmatpush1.msra.mxu0 0.0
    %1225 = vmatprep.subr.mxu0 0.0
    %1226 = vmatpush1.msra.mxu0 0.0
    %1227 = vmatprep.subr.mxu0 0.0
    %1228 = vmatpush1.msra.mxu0 0.0
    %1229 = vmatprep.subr.mxu0 0.0
    %1230 = vmatpush1.msra.mxu0 0.0
    %1231 = vmatprep.subr.mxu0 0.0
    %1232 = vmatpush1.msra.mxu0 0.0
    %1233 = vmatprep.subr.mxu0 0.0
    %1234 = vmatpush1.msra.mxu0 0.0
    %1235 = vmatprep.mubr.f32.mxu0 0.0
    %1236 = vmatmul.mubr.f32.gmra.mrb[0].mxu0 %v413
    %v1237 = vpop.f32.mrb[0].mxu0
    %v1238 = vadd.f32 %v404, %v1237
    %v1239 = vpop.f32.mrb[0].mxu0
    %v1240 = vadd.f32 %v404, %v1239
    %1241 = vmatprep.mubr.f32.mxu0 0.0
    %1242 = vmatmul.mubr.f32.gmra.mrb[0].mxu0 %v416
    %v1243 = vpop.f32.mrb[0].mxu0
    %v1244 = vadd.f32 %v409, %v1243
    %v1245 = vpop.f32.mrb[0].mxu0
    %v1246 = vadd.f32 %v409, %v1245
    %1247 = vdwg.mxu0
    %v1248 = vmax.f32 %v1084, 0.0
    %v1249 = vmax.f32 %v1086, 0.0
    %v1250 = vmax.f32 %v1161, 0.0
    %v1251 = vmax.f32 %v1163, 0.0
    %v1252 = vmax.f32 %v1238, 0.0
    %v1253 = vmax.f32 %v1240, 0.0
    %v1254 = vmax.f32 %v1090, 0.0
    %v1255 = vmax.f32 %v1092, 0.0
    %v1256 = vmax.f32 %v1167, 0.0
    %v1257 = vmax.f32 %v1169, 0.0
    %v1258 = vmax.f32 %v1244, 0.0
    %v1259 = vmax.f32 %v1246, 0.0
    %1260 = vrot.lane.b32.xlu0 %v1248, 127
    %v1261 = vpop.permute.xlu0 %1260
    %1262 = vrot.lane.b32.xlu0 %v1254, 127
    %v1263 = vpop.permute.xlu0 %1262
    %1264 = vrot.lane.b32.xlu0 %v1249, 127
    %v1265 = vpop.permute.xlu0 %1264
    %1266 = vrot.lane.b32.xlu0 %v1255, 127
    %v1267 = vpop.permute.xlu0 %1266
    %1268 = vrot.lane.b32.xlu0 %v1250, 127
    %v1269 = vpop.permute.xlu0 %1268
    %1270 = vrot.lane.b32.xlu0 %v1256, 127
    %v1271 = vpop.permute.xlu0 %1270
    %1272 = vrot.lane.b32.xlu0 %v1251, 127
    %v1273 = vpop.permute.xlu0 %1272
    %1274 = vrot.lane.b32.xlu0 %v1257, 127
    %v1275 = vpop.permute.xlu0 %1274
    %1276 = vrot.lane.b32.xlu0 %v1252, 127
    %v1277 = vpop.permute.xlu0 %1276
    %1278 = vrot.lane.b32.xlu0 %v1258, 127
    %v1279 = vpop.permute.xlu0 %1278
    %1280 = vrot.lane.b32.xlu0 %v1253, 127
    %v1281 = vpop.permute.xlu0 %1280
    %1282 = vrot.lane.b32.xlu0 %v1259, 127
    %v1283 = vpop.permute.xlu0 %1282
    %v1284 = vsel %vm157, %v1277, %v1281
    %v1285 = vsel %vm157, %v1279, %v1283
    %v1286 = vsel %vm157, %v1273, %v1277
    %v1287 = vsel %vm157, %v1275, %v1279
    %v1288 = vsel %vm157, %v1269, %v1273
    %v1289 = vsel %vm157, %v1271, %v1275
    %v1290 = vsel %vm157, %v1265, %v1269
    %v1291 = vsel %vm157, %v1267, %v1271
    %v1292 = vsel %vm157, %v1261, %v1265
    %v1293 = vsel %vm157, %v1263, %v1267
    %v1294 = vsel %vm157, %v1281, %v1261
    %v1295 = vsel %vm157, %v1283, %v1263
    %v1296 = vmax.f32 %v1248, %v1292
    %v1297 = vmax.f32 %v1249, %v1290
    %v1298 = vmax.f32 %v1250, %v1288
    %v1299 = vmax.f32 %v1251, %v1286
    %v1300 = vmax.f32 %v1252, %v1284
    %v1301 = vmax.f32 %v1253, %v1294
    %v1302 = vmax.f32 %v1254, %v1293
    %v1303 = vmax.f32 %v1255, %v1291
    %v1304 = vmax.f32 %v1256, %v1289
    %v1305 = vmax.f32 %v1257, %v1287
    %v1306 = vmax.f32 %v1258, %v1285
    %v1307 = vmax.f32 %v1259, %v1295
    %v1308 = vmul.f32 %v1296, %v77
    %v1309 = vmul.f32 %v1297, %v78
    %v1310 = vmul.f32 %v1298, %v79
    %v1311 = vmul.f32 %v1299, %v80
    %v1312 = vmul.f32 %v1300, %v81
    %v1313 = vmul.f32 %v1301, %v82
    %v1314 = vmul.f32 %v1302, %v83
    %v1315 = vmul.f32 %v1303, %v84
    %v1316 = vmul.f32 %v1304, %v85
    %v1317 = vmul.f32 %v1305, %v86
    %v1318 = vmul.f32 %v1306, %v87
    %v1319 = vmul.f32 %v1307, %v88
    %v1320 = vadd.f32 %v1308, %v1309
    %v1321 = vadd.f32 %v1320, %v1310
    %v1322 = vadd.f32 %v1321, %v1311
    %v1323 = vadd.f32 %v1322, %v1312
    %v1324 = vadd.f32 %v1323, %v1313
    %v1325 = vadd.f32 %v1324, %v1314
    %v1326 = vadd.f32 %v1325, %v1315
    %v1327 = vadd.f32 %v1326, %v1316
    %v1328 = vadd.f32 %v1327, %v1317
    %v1329 = vadd.f32 %v1328, %v1318
    %v1330 = vadd.f32 %v1329, %v1319
    %1331 = vadd.xlane.f32.xlu0 %v1330
    %v1332 = vpop.xlane.xlu0 %1331
    %v1333 = vrot.slane %v1332, 4
    %v1334 = vadd.f32 %v1332, %v1333
    %v1335 = vrot.slane %v1334, 2
    %v1336 = vadd.f32 %v1334, %v1335
    %v1337 = vrot.slane %v1336, 1
    %v1338 = vadd.f32 %v1336, %v1337
    %s1339 = vtos %v1338
    %v1340 = vstv %s1339
    %v1341 = vadd.f32 %v1340, %v743
    %vm1342 = vcmask 7168
    %v1343 = vsel %vm1342, %v744, %v1341
    %vm1344 = vcmask 8192
    %1345 = vst.msk [vmem:[#allocation9] sm:$0x1] %vm1344, %v1343
    // Predicated region
    $region46: #{_juger_forward_impl.1} parent=1 // pred_check
      _
    $region47: #{_juger_forward_impl.1} parent=1 // pred_check_branch
      %1347 = sbr.rel (0) target = $region49
    $region48: #{_juger_forward_impl.1} parent=1 // pred_region
      %s1349 = ssub.s32 16, 16
      %1350 = vsyncadd [#allocation4], %s1349
      %s1352 = sshll.u32 [#allocation9], 4
      %s1353 = int_to_ptr.vmem [resolvable:$true] %s1352
      %1355 = dma.vmem_to_hbm [thread:$0]  %s1353, 16, %s8, [#allocation4]
    $region49: #{_juger_forward_impl.1} parent=1 // pred_fallthru
      _
    // Predicated region
    $region50: #{_juger_forward_impl.1} parent=1 // pred_check
      _
    $region51: #{_juger_forward_impl.1} parent=1 // pred_check_branch
      %1357 = sbr.rel (0) target = $region53
    $region52: #{_juger_forward_impl.1} parent=1 // pred_region
      %1358 = dma.done [#allocation4], 16
    $region53: #{_juger_forward_impl.1} parent=1 // pred_fallthru
      _
    %1359 = vsyncpa [#allocation3], 1
    %1360 = vsyncpa [#allocation4], 1
    %1361 = vsyncpa [#allocation5], 1
    %1362 = vsyncpa [#allocation8], 1

</llo_original>
